<compile_context>
chip_gen: v5e
topology: v5e:2x2
jax: 0.10.0
libtpu: 0.0.40
codegen_flags: <defaults>
</compile_context>

<pallas_src>
import numpy as np
import jax
import jax.numpy as jnp
from jax.experimental import pallas as pl
from jax.experimental.pallas import tpu as pltpu

_EPS = 1e-5
_INV_SQRT2 = 0.7071067811865476


# ----------------------------- kernel helpers ------------------------------
def _sigmoid(x):
    # tanh-form sigmoid: one EUP transcendental instead of exp + reciprocal.
    return 0.5 * (1.0 + jnp.tanh(0.5 * x))


def _softplus(x):
    # numerically stable softplus (matches torch.nn.functional.softplus)
    return jnp.maximum(x, 0.0) + jnp.log(1.0 + jnp.exp(-jnp.abs(x)))


def _erf(x):
    # Abramowitz & Stegun 7.1.26 rational approximation, |err| < 1.5e-7.
    # Only applied to the tiny (Bb, 2S) style-head tensor.
    a1, a2, a3, a4, a5 = (0.254829592, -0.284496736, 1.421413741,
                          -1.453152027, 1.061405429)
    p = 0.3275911
    sign = jnp.where(x >= 0.0, 1.0, -1.0)
    ax = jnp.abs(x)
    t = 1.0 / (1.0 + p * ax)
    poly = ((((a5 * t + a4) * t + a3) * t + a2) * t + a1) * t
    return sign * (1.0 - poly * jnp.exp(-ax * ax))


def _gelu_exact(x):
    # nn.GELU() default (erf-based)
    return 0.5 * x * (1.0 + _erf(x * _INV_SQRT2))


def _layernorm(x, gamma, beta):
    mu = jnp.mean(x, axis=-1, keepdims=True)
    var = jnp.mean((x - mu) ** 2, axis=-1, keepdims=True)
    return (x - mu) * jax.lax.rsqrt(var + _EPS) * gamma + beta


# --------------------------------- kernel ----------------------------------
def _style_extractor_kernel(
    x_ref,                      # (1, Rb, Da)   Rb = Bb*T packed rows (maybe bf16)
    pool_ref,                   # (Bb, Rb)      block-diagonal 1/T pooling matrix
    mfirst_ref, mlast_ref,      # (Rb, 1)       precomputed conv boundary masks
    wp_ref, bp_ref,             # input_proj:  (Da,H), (1,H)
    g0_ref, be0_ref,            # mamba LayerNorm: (1,H), (1,H)
    win_ref,                    # fused in_proj: (H, 2*Di)
    wconv_ref,                  # (3, Di) time-reversed depthwise taps
    wdt_ref, bdt_ref,           # dt_proj: (Di,Di), (1,Di)
    wout_ref, ls_ref,           # out_proj (Di,H) + layer_scale (1,H)
    w1_ref, b1_ref, w2_ref, b2_ref,   # style head linears
    g1_ref, be1_ref,            # style head LayerNorm
    o_ref,                      # (1, Bb, S)
):
    x = x_ref[0]                                                       # (Rb, Da)
    rb = x.shape[0]
    di = wconv_ref.shape[1]

    # ---- input_proj (f32 accumulation regardless of operand dtype) ----
    h = jnp.dot(x, wp_ref[...], preferred_element_type=jnp.float32) + bp_ref[...]
    residual = h                                                       # (Rb, H)

    # ---- Mamba block: LayerNorm (f32) ----
    hn = _layernorm(h, g0_ref[...], be0_ref[...])

    # ---- fused in_proj: one lane-dense (Rb, 2*Di) matmul, then slice ----
    w_in = win_ref[...]
    x12 = jnp.dot(hn.astype(w_in.dtype), w_in,
                  preferred_element_type=jnp.float32)                  # (Rb, 2Di)
    x1 = x12[:, :di]                                                   # (Rb, Di)
    x2 = x12[:, di:]                                                   # (Rb, Di)

    # ---- depthwise conv1d(k=3, pad=1) on the time-reversed sequence, folded
    #      into reversed taps on the un-flipped sequence.  Boundary masks were
    #      built once in the wrapper; they stop the sublane roll from leaking
    #      across sequence boundaries inside the packed (Bb*T) slab.
    wc_prev = wconv_ref[0:1, :]
    wc_mid = wconv_ref[1:2, :]
    wc_next = wconv_ref[2:3, :]
    x1_prev = pltpu.roll(x1, shift=1, axis=0) * mfirst_ref[...]        # x1[t-1]
    x1_next = pltpu.roll(x1, shift=rb - 1, axis=0) * mlast_ref[...]    # x1[t+1]
    x1_conv = x1_prev * wc_prev + x1 * wc_mid + x1_next * wc_next

    # ---- SiLU -> dt_proj -> softplus -> gating (all f32 element-wise) ----
    x1_ssm = x1_conv * _sigmoid(x1_conv)
    w_dt = wdt_ref[...]
    dt = jnp.dot(x1_ssm.astype(w_dt.dtype), w_dt,
                 preferred_element_type=jnp.float32) + bdt_ref[...]
    dt = _softplus(dt)
    x_gated = (x1_ssm * _sigmoid(dt)) * _sigmoid(x2)

    # ---- out_proj + layer_scale + residual (dropout = identity in eval) ----
    w_out = wout_ref[...]
    out = jnp.dot(x_gated.astype(w_out.dtype), w_out,
                  preferred_element_type=jnp.float32)
    processed = out * ls_ref[...] + residual                           # (Rb, H)

    # ---- per-sequence time mean as one MXU matmul (bf16 operands in bf16
    #      path; 1/T is exact in bf16 for power-of-2 T, accumulation f32) ----
    pool = pool_ref[...]
    style_features = jnp.dot(pool, processed.astype(pool.dtype),
                             preferred_element_type=jnp.float32)       # (Bb, H)

    # ---- style head ----
    s1 = jnp.dot(style_features, w1_ref[...],
                 preferred_element_type=jnp.float32) + b1_ref[...]
    s1 = _gelu_exact(s1)                                               # (Bb, 2S)
    s2 = jnp.dot(s1, w2_ref[...],
                 preferred_element_type=jnp.float32) + b2_ref[...]
    o_ref[0] = _layernorm(s2, g1_ref[...], be1_ref[...])               # (Bb, S)


# -------------------------------- wrapper -----------------------------------
def _choose_block_batch(batch, seq_len, target_rows, max_block_batch):
    """Largest Bb dividing B with Bb*T <= target_rows and Bb <= max_block_batch;
    keep >=2 grid steps when B > 1 so both v7x TensorCores get work."""
    best = 1
    for bb in range(1, min(batch, max_block_batch) + 1):
        if batch % bb == 0 and bb * seq_len <= target_rows:
            best = bb
    if best == batch and batch > 1:
        for bb in range(batch // 2, 0, -1):
            if batch % bb == 0:
                best = bb
                break
    return best


def style_extractor_forward(audio_features, params, *,
                            matmul_dtype=jnp.bfloat16,
                            target_rows=2048, max_block_batch=64):
    B, Da, T = audio_features.shape
    S = params["w2"].shape[1]

    Bb = _choose_block_batch(B, T, target_rows, max_block_batch)
    nblk = B // Bb
    Rb = Bb * T

    # (B, Da, T) -> (B, T, Da) -> packed (nblk, Bb*T, Da)
    x = jnp.transpose(audio_features, (0, 2, 1)).astype(jnp.float32)
    x = x.reshape(nblk, Rb, Da).astype(matmul_dtype)

    # block-diagonal per-sequence mean-pooling matrix (built once, constant)
    pool = jnp.asarray(np.kron(np.eye(Bb, dtype=np.float32),
                               np.full((1, T), 1.0 / T, dtype=np.float32)))
    pool = pool.astype(matmul_dtype)

    # conv boundary masks (constant across grid steps -> built once here)
    t_idx = np.arange(Rb) % T
    mask_first = jnp.asarray((t_idx != 0).astype(np.float32).reshape(Rb, 1))
    mask_last = jnp.asarray((t_idx != T - 1).astype(np.float32).reshape(Rb, 1))

    # time-reversed depthwise taps, laid out as (3, Di); stays f32 (VPU only)
    wconv_rev = jnp.asarray(params["wconv"])[:, ::-1].T.astype(jnp.float32)

    # fused in_proj weight (H, 2*Di)
    w_in = jnp.concatenate([params["win1"], params["win2"]], axis=1)

    def mm(w):  # MXU operand dtype (bf16 default on all generations)
        return w.astype(matmul_dtype)

    ordered = [
        x, pool, mask_first, mask_last,
        mm(params["wp"]), params["bp"], params["g0"], params["be0"],
        mm(w_in), wconv_rev,
        mm(params["wdt"]), params["bdt"], mm(params["wout"]), params["ls"],
        params["w1"], params["b1"], params["w2"], params["b2"],
        params["g1"], params["be1"],
    ]

    def full2d(arr):
        r, c = arr.shape
        return pl.BlockSpec((r, c), lambda b: (0, 0))

    in_specs = ([pl.BlockSpec((1, Rb, Da), lambda b: (b, 0, 0))]
                + [full2d(a) for a in ordered[1:]])

    out = pl.pallas_call(
        _style_extractor_kernel,
        out_shape=jax.ShapeDtypeStruct((nblk, Bb, S), jnp.float32),
        grid_spec=pltpu.PrefetchScalarGridSpec(
            num_scalar_prefetch=0,
            grid=(nblk,),
            in_specs=in_specs,
            out_specs=pl.BlockSpec((1, Bb, S), lambda b: (b, 0, 0)),
        ),
        compiler_params=pltpu.CompilerParams(
            dimension_semantics=("parallel",),
            vmem_limit_bytes=64 * 1024 * 1024),
    )(*ordered)
    return out.reshape(B, S)


# ----------------------- deterministic parameter init -----------------------
def make_params(key, audio_dim, hidden_dim=32, style_dim=16, expand_factor=2.0):
    d_inner = int(hidden_dim * expand_factor)
    ks = jax.random.split(key, 10)

    def rnd(k, shape, scale=0.2):
        return scale * jax.random.normal(k, shape, dtype=jnp.float32)

    return dict(
        wp=rnd(ks[0], (audio_dim, hidden_dim)),
        bp=rnd(ks[1], (1, hidden_dim), 0.05),
        g0=jnp.ones((1, hidden_dim), jnp.float32),
        be0=jnp.zeros((1, hidden_dim), jnp.float32),
        win1=rnd(ks[2], (hidden_dim, d_inner)),
        win2=rnd(ks[3], (hidden_dim, d_inner)),
        wconv=rnd(ks[4], (d_inner, 3), 0.3),        # original (Di, 3) taps
        wdt=rnd(ks[5], (d_inner, d_inner)),
        bdt=rnd(ks[6], (1, d_inner), 0.05),
        wout=rnd(ks[7], (d_inner, hidden_dim)),
        ls=0.1 * jnp.ones((1, hidden_dim), jnp.float32),
        w1=rnd(ks[8], (hidden_dim, 2 * style_dim)),
        b1=jnp.zeros((1, 2 * style_dim), jnp.float32),
        w2=rnd(ks[9], (2 * style_dim, style_dim)),
        b2=jnp.zeros((1, style_dim), jnp.float32),
        g1=jnp.ones((1, style_dim), jnp.float32),
        be1=jnp.zeros((1, style_dim), jnp.float32),
    )


# ---------------------- plain-JAX reference (PyTorch math) -------------------
def reference_forward(audio_features, p):
    x = jnp.transpose(audio_features, (0, 2, 1)).astype(jnp.float32)
    h = x @ p["wp"] + p["bp"]
    residual = h
    hn = _layernorm(h, p["g0"], p["be0"])
    hn = hn[:, ::-1, :]                                   # reverse=True flip
    x1 = hn @ p["win1"]
    x2 = hn @ p["win2"]
    w = p["wconv"]                                        # (Di, 3)
    xp = jnp.pad(x1, ((0, 0), (1, 1), (0, 0)))
    conv = (xp[:, :-2, :] * w[:, 0] + xp[:, 1:-1, :] * w[:, 1]
            + xp[:, 2:, :] * w[:, 2])
    x1_ssm = conv * jax.nn.sigmoid(conv)
    dt = jax.nn.softplus(x1_ssm @ p["wdt"] + p["bdt"])
    x1_processed = x1_ssm * jax.nn.sigmoid(dt)
    gated = x1_processed * jax.nn.sigmoid(x2)
    out = (gated @ p["wout"]) * p["ls"]
    out = out[:, ::-1, :]                                 # flip back
    processed = out + residual
    sf = processed.mean(axis=1)
    s1 = sf @ p["w1"] + p["b1"]
    s1 = 0.5 * s1 * (1.0 + jax.scipy.special.erf(s1 * _INV_SQRT2))
    s2 = s1 @ p["w2"] + p["b2"]
    return _layernorm(s2, p["g1"], p["be1"])


# ----------------------------------- main ------------------------------------
if __name__ == "__main__":
    B, audio_dim, T = 2, 8, 16
    hidden_dim, style_dim, expand = 32, 16, 2.0

    key = jax.random.PRNGKey(0)
    k_in, k_par = jax.random.split(key)
    audio = jax.random.normal(k_in, (B, audio_dim, T), dtype=jnp.float32)
    params = make_params(k_par, audio_dim, hidden_dim, style_dim, expand)

    ref = reference_forward(audio, params)

    # f32 MXU operands -- strict tolerance.
    out_f32 = style_extractor_forward(audio, params, matmul_dtype=jnp.float32)
    out_f32 = jax.block_until_ready(out_f32)
    assert out_f32.shape == (B, style_dim)
    np.testing.assert_allclose(np.asarray(out_f32), np.asarray(ref),
                               rtol=2e-3, atol=2e-3)

    # bf16 MXU operands (default path) -- looser tolerance for bf16 rounding.
    out_bf16 = style_extractor_forward(audio, params, matmul_dtype=jnp.bfloat16)
    out_bf16 = jax.block_until_ready(out_bf16)
    np.testing.assert_allclose(np.asarray(out_bf16), np.asarray(ref),
                               rtol=5e-2, atol=5e-2)

    print("KERNEL_OK")
</pallas_src>

<mosaic_0001>
module attributes {stable_mosaic.version = 11 : i64} {
  func.func @_style_extractor_kernel(%arg0: i32, %arg1: memref<1x16x8xf32, #tpu.memory_space<vmem>>, %arg2: memref<1x16xf32, #tpu.memory_space<vmem>>, %arg3: memref<16x1xf32, #tpu.memory_space<vmem>>, %arg4: memref<16x1xf32, #tpu.memory_space<vmem>>, %arg5: memref<8x32xf32, #tpu.memory_space<vmem>>, %arg6: memref<1x32xf32, #tpu.memory_space<vmem>>, %arg7: memref<1x32xf32, #tpu.memory_space<vmem>>, %arg8: memref<1x32xf32, #tpu.memory_space<vmem>>, %arg9: memref<32x128xf32, #tpu.memory_space<vmem>>, %arg10: memref<3x64xf32, #tpu.memory_space<vmem>>, %arg11: memref<64x64xf32, #tpu.memory_space<vmem>>, %arg12: memref<1x64xf32, #tpu.memory_space<vmem>>, %arg13: memref<64x32xf32, #tpu.memory_space<vmem>>, %arg14: memref<1x32xf32, #tpu.memory_space<vmem>>, %arg15: memref<32x32xf32, #tpu.memory_space<vmem>>, %arg16: memref<1x32xf32, #tpu.memory_space<vmem>>, %arg17: memref<32x16xf32, #tpu.memory_space<vmem>>, %arg18: memref<1x16xf32, #tpu.memory_space<vmem>>, %arg19: memref<1x16xf32, #tpu.memory_space<vmem>>, %arg20: memref<1x16xf32, #tpu.memory_space<vmem>>, %arg21: memref<1x1x16xf32, #tpu.memory_space<vmem>>) attributes {dimension_semantics = [#tpu.dimension_semantics<parallel>], iteration_bounds = array<i64: 2>, scalar_prefetch = 0 : i64, scratch_operands = 0 : i64, tpu.core_type = #tpu.core_type<tc>, window_params = [{transform_indices = @transform_0, window_bounds = array<i64: 1, 16, 8>}, {pipeline_mode = #tpu.pipeline_mode<synchronous>, transform_indices = @transform_1, window_bounds = array<i64: 1, 16>}, {pipeline_mode = #tpu.pipeline_mode<synchronous>, transform_indices = @transform_2, window_bounds = array<i64: 16, 1>}, {pipeline_mode = #tpu.pipeline_mode<synchronous>, transform_indices = @transform_3, window_bounds = array<i64: 16, 1>}, {pipeline_mode = #tpu.pipeline_mode<synchronous>, transform_indices = @transform_4, window_bounds = array<i64: 8, 32>}, {pipeline_mode = #tpu.pipeline_mode<synchronous>, transform_indices = @transform_5, window_bounds = array<i64: 1, 32>}, {pipeline_mode = #tpu.pipeline_mode<synchronous>, transform_indices = @transform_6, window_bounds = array<i64: 1, 32>}, {pipeline_mode = #tpu.pipeline_mode<synchronous>, transform_indices = @transform_7, window_bounds = array<i64: 1, 32>}, {pipeline_mode = #tpu.pipeline_mode<synchronous>, transform_indices = @transform_8, window_bounds = array<i64: 32, 128>}, {pipeline_mode = #tpu.pipeline_mode<synchronous>, transform_indices = @transform_9, window_bounds = array<i64: 3, 64>}, {pipeline_mode = #tpu.pipeline_mode<synchronous>, transform_indices = @transform_10, window_bounds = array<i64: 64, 64>}, {pipeline_mode = #tpu.pipeline_mode<synchronous>, transform_indices = @transform_11, window_bounds = array<i64: 1, 64>}, {pipeline_mode = #tpu.pipeline_mode<synchronous>, transform_indices = @transform_12, window_bounds = array<i64: 64, 32>}, {pipeline_mode = #tpu.pipeline_mode<synchronous>, transform_indices = @transform_13, window_bounds = array<i64: 1, 32>}, {pipeline_mode = #tpu.pipeline_mode<synchronous>, transform_indices = @transform_14, window_bounds = array<i64: 32, 32>}, {pipeline_mode = #tpu.pipeline_mode<synchronous>, transform_indices = @transform_15, window_bounds = array<i64: 1, 32>}, {pipeline_mode = #tpu.pipeline_mode<synchronous>, transform_indices = @transform_16, window_bounds = array<i64: 32, 16>}, {pipeline_mode = #tpu.pipeline_mode<synchronous>, transform_indices = @transform_17, window_bounds = array<i64: 1, 16>}, {pipeline_mode = #tpu.pipeline_mode<synchronous>, transform_indices = @transform_18, window_bounds = array<i64: 1, 16>}, {pipeline_mode = #tpu.pipeline_mode<synchronous>, transform_indices = @transform_19, window_bounds = array<i64: 1, 16>}, {transform_indices = @transform_20, window_bounds = array<i64: 1, 1, 16>}]} {
    %c0 = arith.constant 0 : index
    %c0_0 = arith.constant 0 : index
    %c0_1 = arith.constant 0 : index
    %0 = vector.load %arg1[%c0, %c0_0, %c0_1] : memref<1x16x8xf32, #tpu.memory_space<vmem>>, vector<1x16x8xf32>
    %1 = vector.shape_cast %0 : vector<1x16x8xf32> to vector<16x8xf32>
    %c0_2 = arith.constant 0 : index
    %c0_3 = arith.constant 0 : index
    %2 = vector.load %arg5[%c0_2, %c0_3] : memref<8x32xf32, #tpu.memory_space<vmem>>, vector<8x32xf32>
    %cst = arith.constant dense<0.000000e+00> : vector<16x32xf32>
    %3 = tpu.matmul %1, %2, %cst {dimension_numbers = #tpu.dot_dimension_numbers<[1], [0], [0], [1], [0, 0, 1, 1], [], []>} : vector<16x8xf32>, vector<8x32xf32>, vector<16x32xf32> -> vector<16x32xf32>
    %c0_4 = arith.constant 0 : index
    %c0_5 = arith.constant 0 : index
    %4 = vector.load %arg6[%c0_4, %c0_5] : memref<1x32xf32, #tpu.memory_space<vmem>>, vector<1x32xf32>
    %5 = vector.broadcast %4 : vector<1x32xf32> to vector<16x32xf32>
    %6 = arith.addf %3, %5 : vector<16x32xf32>
    %c0_6 = arith.constant 0 : index
    %c0_7 = arith.constant 0 : index
    %7 = vector.load %arg7[%c0_6, %c0_7] : memref<1x32xf32, #tpu.memory_space<vmem>>, vector<1x32xf32>
    %c0_8 = arith.constant 0 : index
    %c0_9 = arith.constant 0 : index
    %8 = vector.load %arg8[%c0_8, %c0_9] : memref<1x32xf32, #tpu.memory_space<vmem>>, vector<1x32xf32>
    %cst_10 = arith.constant dense<0.000000e+00> : vector<16xf32>
    %9 = vector.multi_reduction <add>, %6, %cst_10 [1] : vector<16x32xf32> to vector<16xf32>
    %10 = vector.shape_cast %9 : vector<16xf32> to vector<16x1xf32>
    %cst_11 = arith.constant 3.200000e+01 : f32
    %11 = vector.broadcast %cst_11 : f32 to vector<16x1xf32>
    %12 = arith.divf %10, %11 : vector<16x1xf32>
    %13 = vector.broadcast %12 : vector<16x1xf32> to vector<16x32xf32>
    %14 = arith.subf %6, %13 : vector<16x32xf32>
    %15 = arith.mulf %14, %14 : vector<16x32xf32>
    %cst_12 = arith.constant dense<0.000000e+00> : vector<16xf32>
    %16 = vector.multi_reduction <add>, %15, %cst_12 [1] : vector<16x32xf32> to vector<16xf32>
    %17 = vector.shape_cast %16 : vector<16xf32> to vector<16x1xf32>
    %cst_13 = arith.constant 3.200000e+01 : f32
    %18 = vector.broadcast %cst_13 : f32 to vector<16x1xf32>
    %19 = arith.divf %17, %18 : vector<16x1xf32>
    %20 = vector.broadcast %12 : vector<16x1xf32> to vector<16x32xf32>
    %21 = arith.subf %6, %20 : vector<16x32xf32>
    %cst_14 = arith.constant 9.99999974E-6 : f32
    %22 = vector.broadcast %cst_14 : f32 to vector<16x1xf32>
    %23 = arith.addf %19, %22 : vector<16x1xf32>
    %24 = math.rsqrt %23 : vector<16x1xf32>
    %25 = vector.broadcast %24 : vector<16x1xf32> to vector<16x32xf32>
    %26 = arith.mulf %21, %25 : vector<16x32xf32>
    %27 = vector.broadcast %7 : vector<1x32xf32> to vector<16x32xf32>
    %28 = arith.mulf %26, %27 : vector<16x32xf32>
    %29 = vector.broadcast %8 : vector<1x32xf32> to vector<16x32xf32>
    %30 = arith.addf %28, %29 : vector<16x32xf32>
    %c0_15 = arith.constant 0 : index
    %c0_16 = arith.constant 0 : index
    %31 = vector.load %arg9[%c0_15, %c0_16] : memref<32x128xf32, #tpu.memory_space<vmem>>, vector<32x128xf32>
    %cst_17 = arith.constant dense<0.000000e+00> : vector<16x128xf32>
    %32 = tpu.matmul %30, %31, %cst_17 {dimension_numbers = #tpu.dot_dimension_numbers<[1], [0], [0], [1], [0, 0, 1, 1], [], []>} : vector<16x32xf32>, vector<32x128xf32>, vector<16x128xf32> -> vector<16x128xf32>
    %33 = vector.extract_strided_slice %32 {offsets = [0, 0], sizes = [16, 64], strides = [1, 1]} : vector<16x128xf32> to vector<16x64xf32>
    %34 = vector.extract_strided_slice %32 {offsets = [0, 64], sizes = [16, 64], strides = [1, 1]} : vector<16x128xf32> to vector<16x64xf32>
    %c0_18 = arith.constant 0 : index
    %c0_19 = arith.constant 0 : index
    %35 = vector.load %arg10[%c0_18, %c0_19] : memref<3x64xf32, #tpu.memory_space<vmem>>, vector<1x64xf32>
    %c1 = arith.constant 1 : index
    %c0_20 = arith.constant 0 : index
    %36 = vector.load %arg10[%c1, %c0_20] : memref<3x64xf32, #tpu.memory_space<vmem>>, vector<1x64xf32>
    %c2 = arith.constant 2 : index
    %c0_21 = arith.constant 0 : index
    %37 = vector.load %arg10[%c2, %c0_21] : memref<3x64xf32, #tpu.memory_space<vmem>>, vector<1x64xf32>
    %c1_i32 = arith.constant 1 : i32
    %38 = tpu.dynamic_rotate %33 by %c1_i32 dim 0 : vector<16x64xf32>, i32 -> vector<16x64xf32>
    %c0_22 = arith.constant 0 : index
    %c0_23 = arith.constant 0 : index
    %39 = vector.load %arg3[%c0_22, %c0_23] : memref<16x1xf32, #tpu.memory_space<vmem>>, vector<16x1xf32>
    %40 = vector.broadcast %39 : vector<16x1xf32> to vector<16x64xf32>
    %41 = arith.mulf %38, %40 : vector<16x64xf32>
    %c15_i32 = arith.constant 15 : i32
    %42 = tpu.dynamic_rotate %33 by %c15_i32 dim 0 : vector<16x64xf32>, i32 -> vector<16x64xf32>
    %c0_24 = arith.constant 0 : index
    %c0_25 = arith.constant 0 : index
    %43 = vector.load %arg4[%c0_24, %c0_25] : memref<16x1xf32, #tpu.memory_space<vmem>>, vector<16x1xf32>
    %44 = vector.broadcast %43 : vector<16x1xf32> to vector<16x64xf32>
    %45 = arith.mulf %42, %44 : vector<16x64xf32>
    %46 = vector.broadcast %35 : vector<1x64xf32> to vector<16x64xf32>
    %47 = arith.mulf %41, %46 : vector<16x64xf32>
    %48 = vector.broadcast %36 : vector<1x64xf32> to vector<16x64xf32>
    %49 = arith.mulf %33, %48 : vector<16x64xf32>
    %50 = arith.addf %47, %49 : vector<16x64xf32>
    %51 = vector.broadcast %37 : vector<1x64xf32> to vector<16x64xf32>
    %52 = arith.mulf %45, %51 : vector<16x64xf32>
    %53 = arith.addf %50, %52 : vector<16x64xf32>
    %cst_26 = arith.constant 5.000000e-01 : f32
    %54 = vector.broadcast %cst_26 : f32 to vector<16x64xf32>
    %55 = arith.mulf %54, %53 : vector<16x64xf32>
    %56 = math.tanh %55 : vector<16x64xf32>
    %cst_27 = arith.constant 1.000000e+00 : f32
    %57 = vector.broadcast %cst_27 : f32 to vector<16x64xf32>
    %58 = arith.addf %57, %56 : vector<16x64xf32>
    %cst_28 = arith.constant 5.000000e-01 : f32
    %59 = vector.broadcast %cst_28 : f32 to vector<16x64xf32>
    %60 = arith.mulf %59, %58 : vector<16x64xf32>
    %61 = arith.mulf %53, %60 : vector<16x64xf32>
    %c0_29 = arith.constant 0 : index
    %c0_30 = arith.constant 0 : index
    %62 = vector.load %arg11[%c0_29, %c0_30] : memref<64x64xf32, #tpu.memory_space<vmem>>, vector<64x64xf32>
    %cst_31 = arith.constant dense<0.000000e+00> : vector<16x64xf32>
    %63 = tpu.matmul %61, %62, %cst_31 {dimension_numbers = #tpu.dot_dimension_numbers<[1], [0], [0], [1], [0, 0, 1, 1], [], []>} : vector<16x64xf32>, vector<64x64xf32>, vector<16x64xf32> -> vector<16x64xf32>
    %c0_32 = arith.constant 0 : index
    %c0_33 = arith.constant 0 : index
    %64 = vector.load %arg12[%c0_32, %c0_33] : memref<1x64xf32, #tpu.memory_space<vmem>>, vector<1x64xf32>
    %65 = vector.broadcast %64 : vector<1x64xf32> to vector<16x64xf32>
    %66 = arith.addf %63, %65 : vector<16x64xf32>
    %cst_34 = arith.constant 0.000000e+00 : f32
    %67 = vector.broadcast %cst_34 : f32 to vector<16x64xf32>
    %68 = arith.maximumf %66, %67 : vector<16x64xf32>
    %69 = math.absf %66 : vector<16x64xf32>
    %cst_35 = arith.constant 0.000000e+00 : f32
    %70 = vector.broadcast %cst_35 : f32 to vector<16x64xf32>
    %71 = arith.subf %70, %69 : vector<16x64xf32>
    %72 = math.exp %71 : vector<16x64xf32>
    %cst_36 = arith.constant 1.000000e+00 : f32
    %73 = vector.broadcast %cst_36 : f32 to vector<16x64xf32>
    %74 = arith.addf %73, %72 : vector<16x64xf32>
    %75 = math.log %74 : vector<16x64xf32>
    %76 = arith.addf %68, %75 : vector<16x64xf32>
    %cst_37 = arith.constant 5.000000e-01 : f32
    %77 = vector.broadcast %cst_37 : f32 to vector<16x64xf32>
    %78 = arith.mulf %77, %76 : vector<16x64xf32>
    %79 = math.tanh %78 : vector<16x64xf32>
    %cst_38 = arith.constant 1.000000e+00 : f32
    %80 = vector.broadcast %cst_38 : f32 to vector<16x64xf32>
    %81 = arith.addf %80, %79 : vector<16x64xf32>
    %cst_39 = arith.constant 5.000000e-01 : f32
    %82 = vector.broadcast %cst_39 : f32 to vector<16x64xf32>
    %83 = arith.mulf %82, %81 : vector<16x64xf32>
    %84 = arith.mulf %61, %83 : vector<16x64xf32>
    %cst_40 = arith.constant 5.000000e-01 : f32
    %85 = vector.broadcast %cst_40 : f32 to vector<16x64xf32>
    %86 = arith.mulf %85, %34 : vector<16x64xf32>
    %87 = math.tanh %86 : vector<16x64xf32>
    %cst_41 = arith.constant 1.000000e+00 : f32
    %88 = vector.broadcast %cst_41 : f32 to vector<16x64xf32>
    %89 = arith.addf %88, %87 : vector<16x64xf32>
    %cst_42 = arith.constant 5.000000e-01 : f32
    %90 = vector.broadcast %cst_42 : f32 to vector<16x64xf32>
    %91 = arith.mulf %90, %89 : vector<16x64xf32>
    %92 = arith.mulf %84, %91 : vector<16x64xf32>
    %c0_43 = arith.constant 0 : index
    %c0_44 = arith.constant 0 : index
    %93 = vector.load %arg13[%c0_43, %c0_44] : memref<64x32xf32, #tpu.memory_space<vmem>>, vector<64x32xf32>
    %cst_45 = arith.constant dense<0.000000e+00> : vector<16x32xf32>
    %94 = tpu.matmul %92, %93, %cst_45 {dimension_numbers = #tpu.dot_dimension_numbers<[1], [0], [0], [1], [0, 0, 1, 1], [], []>} : vector<16x64xf32>, vector<64x32xf32>, vector<16x32xf32> -> vector<16x32xf32>
    %c0_46 = arith.constant 0 : index
    %c0_47 = arith.constant 0 : index
    %95 = vector.load %arg14[%c0_46, %c0_47] : memref<1x32xf32, #tpu.memory_space<vmem>>, vector<1x32xf32>
    %96 = vector.broadcast %95 : vector<1x32xf32> to vector<16x32xf32>
    %97 = arith.mulf %94, %96 : vector<16x32xf32>
    %98 = arith.addf %97, %6 : vector<16x32xf32>
    %c0_48 = arith.constant 0 : index
    %c0_49 = arith.constant 0 : index
    %99 = vector.load %arg2[%c0_48, %c0_49] : memref<1x16xf32, #tpu.memory_space<vmem>>, vector<1x16xf32>
    %cst_50 = arith.constant dense<0.000000e+00> : vector<1x32xf32>
    %100 = tpu.matmul %99, %98, %cst_50 {dimension_numbers = #tpu.dot_dimension_numbers<[1], [0], [0], [1], [0, 0, 1, 1], [], []>} : vector<1x16xf32>, vector<16x32xf32>, vector<1x32xf32> -> vector<1x32xf32>
    %c0_51 = arith.constant 0 : index
    %c0_52 = arith.constant 0 : index
    %101 = vector.load %arg15[%c0_51, %c0_52] : memref<32x32xf32, #tpu.memory_space<vmem>>, vector<32x32xf32>
    %cst_53 = arith.constant dense<0.000000e+00> : vector<1x32xf32>
    %102 = tpu.matmul %100, %101, %cst_53 {dimension_numbers = #tpu.dot_dimension_numbers<[1], [0], [0], [1], [0, 0, 1, 1], [], []>} : vector<1x32xf32>, vector<32x32xf32>, vector<1x32xf32> -> vector<1x32xf32>
    %c0_54 = arith.constant 0 : index
    %c0_55 = arith.constant 0 : index
    %103 = vector.load %arg16[%c0_54, %c0_55] : memref<1x32xf32, #tpu.memory_space<vmem>>, vector<1x32xf32>
    %104 = arith.addf %102, %103 : vector<1x32xf32>
    %cst_56 = arith.constant 5.000000e-01 : f32
    %105 = vector.broadcast %cst_56 : f32 to vector<1x32xf32>
    %106 = arith.mulf %105, %104 : vector<1x32xf32>
    %cst_57 = arith.constant 0.707106769 : f32
    %107 = vector.broadcast %cst_57 : f32 to vector<1x32xf32>
    %108 = arith.mulf %104, %107 : vector<1x32xf32>
    %cst_58 = arith.constant 0.000000e+00 : f32
    %109 = vector.broadcast %cst_58 : f32 to vector<1x32xf32>
    %110 = arith.cmpf oge, %108, %109 : vector<1x32xf32>
    %cst_59 = arith.constant 1.000000e+00 : f32
    %cst_60 = arith.constant -1.000000e+00 : f32
    %111 = vector.broadcast %cst_59 : f32 to vector<1x32xf32>
    %112 = vector.broadcast %cst_60 : f32 to vector<1x32xf32>
    %113 = arith.select %110, %111, %112 : vector<1x32xi1>, vector<1x32xf32>
    %114 = math.absf %108 : vector<1x32xf32>
    %cst_61 = arith.constant 0.327591091 : f32
    %115 = vector.broadcast %cst_61 : f32 to vector<1x32xf32>
    %116 = arith.mulf %115, %114 : vector<1x32xf32>
    %cst_62 = arith.constant 1.000000e+00 : f32
    %117 = vector.broadcast %cst_62 : f32 to vector<1x32xf32>
    %118 = arith.addf %117, %116 : vector<1x32xf32>
    %cst_63 = arith.constant 1.000000e+00 : f32
    %119 = vector.broadcast %cst_63 : f32 to vector<1x32xf32>
    %120 = arith.divf %119, %118 : vector<1x32xf32>
    %cst_64 = arith.constant 1.06140542 : f32
    %121 = vector.broadcast %cst_64 : f32 to vector<1x32xf32>
    %122 = arith.mulf %121, %120 : vector<1x32xf32>
    %cst_65 = arith.constant -1.45315206 : f32
    %123 = vector.broadcast %cst_65 : f32 to vector<1x32xf32>
    %124 = arith.addf %122, %123 : vector<1x32xf32>
    %125 = arith.mulf %124, %120 : vector<1x32xf32>
    %cst_66 = arith.constant 1.42141378 : f32
    %126 = vector.broadcast %cst_66 : f32 to vector<1x32xf32>
    %127 = arith.addf %125, %126 : vector<1x32xf32>
    %128 = arith.mulf %127, %120 : vector<1x32xf32>
    %cst_67 = arith.constant -0.284496725 : f32
    %129 = vector.broadcast %cst_67 : f32 to vector<1x32xf32>
    %130 = arith.addf %128, %129 : vector<1x32xf32>
    %131 = arith.mulf %130, %120 : vector<1x32xf32>
    %cst_68 = arith.constant 0.254829586 : f32
    %132 = vector.broadcast %cst_68 : f32 to vector<1x32xf32>
    %133 = arith.addf %131, %132 : vector<1x32xf32>
    %134 = arith.mulf %133, %120 : vector<1x32xf32>
    %cst_69 = arith.constant 0.000000e+00 : f32
    %135 = vector.broadcast %cst_69 : f32 to vector<1x32xf32>
    %136 = arith.subf %135, %114 : vector<1x32xf32>
    %137 = arith.mulf %136, %114 : vector<1x32xf32>
    %138 = math.exp %137 : vector<1x32xf32>
    %139 = arith.mulf %134, %138 : vector<1x32xf32>
    %cst_70 = arith.constant 1.000000e+00 : f32
    %140 = vector.broadcast %cst_70 : f32 to vector<1x32xf32>
    %141 = arith.subf %140, %139 : vector<1x32xf32>
    %142 = arith.mulf %113, %141 : vector<1x32xf32>
    %cst_71 = arith.constant 1.000000e+00 : f32
    %143 = vector.broadcast %cst_71 : f32 to vector<1x32xf32>
    %144 = arith.addf %143, %142 : vector<1x32xf32>
    %145 = arith.mulf %106, %144 : vector<1x32xf32>
    %c0_72 = arith.constant 0 : index
    %c0_73 = arith.constant 0 : index
    %146 = vector.load %arg17[%c0_72, %c0_73] : memref<32x16xf32, #tpu.memory_space<vmem>>, vector<32x16xf32>
    %cst_74 = arith.constant dense<0.000000e+00> : vector<1x16xf32>
    %147 = tpu.matmul %145, %146, %cst_74 {dimension_numbers = #tpu.dot_dimension_numbers<[1], [0], [0], [1], [0, 0, 1, 1], [], []>} : vector<1x32xf32>, vector<32x16xf32>, vector<1x16xf32> -> vector<1x16xf32>
    %c0_75 = arith.constant 0 : index
    %c0_76 = arith.constant 0 : index
    %148 = vector.load %arg18[%c0_75, %c0_76] : memref<1x16xf32, #tpu.memory_space<vmem>>, vector<1x16xf32>
    %149 = arith.addf %147, %148 : vector<1x16xf32>
    %c0_77 = arith.constant 0 : index
    %c0_78 = arith.constant 0 : index
    %150 = vector.load %arg19[%c0_77, %c0_78] : memref<1x16xf32, #tpu.memory_space<vmem>>, vector<1x16xf32>
    %c0_79 = arith.constant 0 : index
    %c0_80 = arith.constant 0 : index
    %151 = vector.load %arg20[%c0_79, %c0_80] : memref<1x16xf32, #tpu.memory_space<vmem>>, vector<1x16xf32>
    %cst_81 = arith.constant dense<0.000000e+00> : vector<1xf32>
    %152 = vector.multi_reduction <add>, %149, %cst_81 [1] : vector<1x16xf32> to vector<1xf32>
    %153 = vector.shape_cast %152 : vector<1xf32> to vector<1x1xf32>
    %cst_82 = arith.constant 1.600000e+01 : f32
    %154 = vector.broadcast %cst_82 : f32 to vector<1x1xf32>
    %155 = arith.divf %153, %154 : vector<1x1xf32>
    %156 = vector.broadcast %155 : vector<1x1xf32> to vector<1x16xf32>
    %157 = arith.subf %149, %156 : vector<1x16xf32>
    %158 = arith.mulf %157, %157 : vector<1x16xf32>
    %cst_83 = arith.constant dense<0.000000e+00> : vector<1xf32>
    %159 = vector.multi_reduction <add>, %158, %cst_83 [1] : vector<1x16xf32> to vector<1xf32>
    %160 = vector.shape_cast %159 : vector<1xf32> to vector<1x1xf32>
    %cst_84 = arith.constant 1.600000e+01 : f32
    %161 = vector.broadcast %cst_84 : f32 to vector<1x1xf32>
    %162 = arith.divf %160, %161 : vector<1x1xf32>
    %163 = vector.broadcast %155 : vector<1x1xf32> to vector<1x16xf32>
    %164 = arith.subf %149, %163 : vector<1x16xf32>
    %cst_85 = arith.constant 9.99999974E-6 : f32
    %165 = vector.broadcast %cst_85 : f32 to vector<1x1xf32>
    %166 = arith.addf %162, %165 : vector<1x1xf32>
    %167 = math.rsqrt %166 : vector<1x1xf32>
    %168 = vector.broadcast %167 : vector<1x1xf32> to vector<1x16xf32>
    %169 = arith.mulf %164, %168 : vector<1x16xf32>
    %170 = arith.mulf %169, %150 : vector<1x16xf32>
    %171 = arith.addf %170, %151 : vector<1x16xf32>
    %c0_86 = arith.constant 0 : index
    %c0_87 = arith.constant 0 : index
    %c0_88 = arith.constant 0 : index
    %172 = vector.load %arg21[%c0_86, %c0_87, %c0_88] : memref<1x1x16xf32, #tpu.memory_space<vmem>>, vector<1x1x16xf32>
    %173 = vector.shape_cast %172 : vector<1x1x16xf32> to vector<1x16xf32>
    %174 = vector.shape_cast %171 : vector<1x16xf32> to vector<1x1x16xf32>
    tpu.vector_store %arg21[%c0_86, %c0_87, %c0_88], %174 {strides = array<i32>} : memref<1x1x16xf32, #tpu.memory_space<vmem>>, vector<1x1x16xf32>,
    return
  }
  func.func @transform_0(%arg0: i32) -> (i32, i32, i32) {
    %c0_i32 = arith.constant 0 : i32
    %c0_i32_0 = arith.constant 0 : i32
    %c0_i32_1 = arith.constant 0 : i32
    return %arg0, %c0_i32, %c0_i32_0 : i32, i32, i32
  }
  func.func @transform_1(%arg0: i32) -> (i32, i32) {
    %c0_i32 = arith.constant 0 : i32
    %c0_i32_0 = arith.constant 0 : i32
    %c0_i32_1 = arith.constant 0 : i32
    return %c0_i32, %c0_i32_0 : i32, i32
  }
  func.func @transform_2(%arg0: i32) -> (i32, i32) {
    %c0_i32 = arith.constant 0 : i32
    %c0_i32_0 = arith.constant 0 : i32
    %c0_i32_1 = arith.constant 0 : i32
    return %c0_i32, %c0_i32_0 : i32, i32
  }
  func.func @transform_3(%arg0: i32) -> (i32, i32) {
    %c0_i32 = arith.constant 0 : i32
    %c0_i32_0 = arith.constant 0 : i32
    %c0_i32_1 = arith.constant 0 : i32
    return %c0_i32, %c0_i32_0 : i32, i32
  }
  func.func @transform_4(%arg0: i32) -> (i32, i32) {
    %c0_i32 = arith.constant 0 : i32
    %c0_i32_0 = arith.constant 0 : i32
    %c0_i32_1 = arith.constant 0 : i32
    return %c0_i32, %c0_i32_0 : i32, i32
  }
  func.func @transform_5(%arg0: i32) -> (i32, i32) {
    %c0_i32 = arith.constant 0 : i32
    %c0_i32_0 = arith.constant 0 : i32
    %c0_i32_1 = arith.constant 0 : i32
    return %c0_i32, %c0_i32_0 : i32, i32
  }
  func.func @transform_6(%arg0: i32) -> (i32, i32) {
    %c0_i32 = arith.constant 0 : i32
    %c0_i32_0 = arith.constant 0 : i32
    %c0_i32_1 = arith.constant 0 : i32
    return %c0_i32, %c0_i32_0 : i32, i32
  }
  func.func @transform_7(%arg0: i32) -> (i32, i32) {
    %c0_i32 = arith.constant 0 : i32
    %c0_i32_0 = arith.constant 0 : i32
    %c0_i32_1 = arith.constant 0 : i32
    return %c0_i32, %c0_i32_0 : i32, i32
  }
  func.func @transform_8(%arg0: i32) -> (i32, i32) {
    %c0_i32 = arith.constant 0 : i32
    %c0_i32_0 = arith.constant 0 : i32
    %c0_i32_1 = arith.constant 0 : i32
    return %c0_i32, %c0_i32_0 : i32, i32
  }
  func.func @transform_9(%arg0: i32) -> (i32, i32) {
    %c0_i32 = arith.constant 0 : i32
    %c0_i32_0 = arith.constant 0 : i32
    %c0_i32_1 = arith.constant 0 : i32
    return %c0_i32, %c0_i32_0 : i32, i32
  }
  func.func @transform_10(%arg0: i32) -> (i32, i32) {
    %c0_i32 = arith.constant 0 : i32
    %c0_i32_0 = arith.constant 0 : i32
    %c0_i32_1 = arith.constant 0 : i32
    return %c0_i32, %c0_i32_0 : i32, i32
  }
  func.func @transform_11(%arg0: i32) -> (i32, i32) {
    %c0_i32 = arith.constant 0 : i32
    %c0_i32_0 = arith.constant 0 : i32
    %c0_i32_1 = arith.constant 0 : i32
    return %c0_i32, %c0_i32_0 : i32, i32
  }
  func.func @transform_12(%arg0: i32) -> (i32, i32) {
    %c0_i32 = arith.constant 0 : i32
    %c0_i32_0 = arith.constant 0 : i32
    %c0_i32_1 = arith.constant 0 : i32
    return %c0_i32, %c0_i32_0 : i32, i32
  }
  func.func @transform_13(%arg0: i32) -> (i32, i32) {
    %c0_i32 = arith.constant 0 : i32
    %c0_i32_0 = arith.constant 0 : i32
    %c0_i32_1 = arith.constant 0 : i32
    return %c0_i32, %c0_i32_0 : i32, i32
  }
  func.func @transform_14(%arg0: i32) -> (i32, i32) {
    %c0_i32 = arith.constant 0 : i32
    %c0_i32_0 = arith.constant 0 : i32
    %c0_i32_1 = arith.constant 0 : i32
    return %c0_i32, %c0_i32_0 : i32, i32
  }
  func.func @transform_15(%arg0: i32) -> (i32, i32) {
    %c0_i32 = arith.constant 0 : i32
    %c0_i32_0 = arith.constant 0 : i32
    %c0_i32_1 = arith.constant 0 : i32
    return %c0_i32, %c0_i32_0 : i32, i32
  }
  func.func @transform_16(%arg0: i32) -> (i32, i32) {
    %c0_i32 = arith.constant 0 : i32
    %c0_i32_0 = arith.constant 0 : i32
    %c0_i32_1 = arith.constant 0 : i32
    return %c0_i32, %c0_i32_0 : i32, i32
  }
  func.func @transform_17(%arg0: i32) -> (i32, i32) {
    %c0_i32 = arith.constant 0 : i32
    %c0_i32_0 = arith.constant 0 : i32
    %c0_i32_1 = arith.constant 0 : i32
    return %c0_i32, %c0_i32_0 : i32, i32
  }
  func.func @transform_18(%arg0: i32) -> (i32, i32) {
    %c0_i32 = arith.constant 0 : i32
    %c0_i32_0 = arith.constant 0 : i32
    %c0_i32_1 = arith.constant 0 : i32
    return %c0_i32, %c0_i32_0 : i32, i32
  }
  func.func @transform_19(%arg0: i32) -> (i32, i32) {
    %c0_i32 = arith.constant 0 : i32
    %c0_i32_0 = arith.constant 0 : i32
    %c0_i32_1 = arith.constant 0 : i32
    return %c0_i32, %c0_i32_0 : i32, i32
  }
  func.func @transform_20(%arg0: i32) -> (i32, i32, i32) {
    %c0_i32 = arith.constant 0 : i32
    %c0_i32_0 = arith.constant 0 : i32
    %c0_i32_1 = arith.constant 0 : i32
    return %arg0, %c0_i32, %c0_i32_0 : i32, i32, i32
  }
}

</mosaic_0001>

<llo_original>
// kernel: tpu_custom_call.1
$region0: #{tpu_custom_call.1}
  #allocation0 [shape = 'u32[]', space=smem, size = 0x4, offset = 0x4, fixed_abs, tag = 'smem constant byte address 0x4 - core index']
  #allocation1 [shape = 'u32[72,128]{1,0:T(1,128)}', space=vmem, size = 0x9000, scoped, tag = 'internal scratch']
  %s0 = inlined_call_operand.vmem [shape: f32[2,16,8], index: 0, kind: input, shape index: {}]
  %s1 = inlined_call_operand.vmem [shape: f32[1,16], index: 1, kind: input, shape index: {}]
  %s2 = inlined_call_operand.vmem [shape: f32[16,1], index: 2, kind: input, shape index: {}]
  %s3 = inlined_call_operand.vmem [shape: f32[16,1], index: 3, kind: input, shape index: {}]
  %s4 = inlined_call_operand.vmem [shape: f32[8,32], index: 4, kind: input, shape index: {}]
  %s5 = inlined_call_operand.vmem [shape: f32[1,32], index: 5, kind: input, shape index: {}]
  %s6 = inlined_call_operand.vmem [shape: f32[1,32], index: 6, kind: input, shape index: {}]
  %s7 = inlined_call_operand.vmem [shape: f32[1,32], index: 7, kind: input, shape index: {}]
  %s8 = inlined_call_operand.vmem [shape: f32[32,128], index: 8, kind: input, shape index: {}]
  %s9 = inlined_call_operand.vmem [shape: f32[3,64], index: 9, kind: input, shape index: {}]
  %s10 = inlined_call_operand.vmem [shape: f32[64,64], index: 10, kind: input, shape index: {}]
  %s11 = inlined_call_operand.vmem [shape: f32[1,64], index: 11, kind: input, shape index: {}]
  %s12 = inlined_call_operand.vmem [shape: f32[64,32], index: 12, kind: input, shape index: {}]
  %s13 = inlined_call_operand.vmem [shape: f32[1,32], index: 13, kind: input, shape index: {}]
  %s14 = inlined_call_operand.vmem [shape: f32[32,32], index: 14, kind: input, shape index: {}]
  %s15 = inlined_call_operand.vmem [shape: f32[1,32], index: 15, kind: input, shape index: {}]
  %s16 = inlined_call_operand.vmem [shape: f32[32,16], index: 16, kind: input, shape index: {}]
  %s17 = inlined_call_operand.vmem [shape: f32[1,16], index: 17, kind: input, shape index: {}]
  %s18 = inlined_call_operand.vmem [shape: f32[1,16], index: 18, kind: input, shape index: {}]
  %s19 = inlined_call_operand.vmem [shape: f32[1,16], index: 19, kind: input, shape index: {}]
  %s20 = inlined_call_operand.hbm [shape: f32[2,1,16], index: 20, kind: output, shape index: {}]
  %s21 = sld [smem:[#allocation0]]
  $region113: #{tpu_custom_call.1} parent=0
    _
  %s23 = ssub.s32 1, %s21
  %s24 = scalar_select 0, %s23, %s21
  $region1: #{tpu_custom_call.1} parent=0
    #allocation2 [shape = 'u8[1024]{0}', space=vmem, size = 0x400, scoped, tag = 'output window, operand 0']
    #allocation3 [shape = 's32[2]{0}', space=sflag, size = 0x8, scoped, tag = 'scoped memory for tpu_custom_call.1']
    %25 = vsyncpa [#allocation3], 0
    %s26 = scalar_lea.sflag [#allocation3], 1
    %27 = vsyncpa %s26, 0
    loop: start=0, step=1, limit=4
    $region2: #{tpu_custom_call.1} parent=1 // loop_pre_header
      _
    $region3: #{tpu_custom_call.1} parent=1 // loop_header
      %s29 = sphi 0, %s33
      %p30 = scmp.ge.s32.totalorder %s29, 4
      %s39 = sphi 0, %s41
      %s42 = sphi 0, %s39
      %s43 = sphi 0, %s42
      %s59 = sphi 0, %s43
      %s63 = sphi 0, %s63
      %s65 = sphi 0, %s63
      %s66 = sphi 0, %s65
      %s80 = sphi 0, %s66
      %s84 = sphi 0, %s84
      %s86 = sphi 0, %s84
      %s87 = sphi 0, %s86
      %s101 = sphi 0, %s87
      %s105 = sphi 0, %s105
      %s107 = sphi 0, %s105
      %s108 = sphi 0, %s107
      %s122 = sphi 0, %s108
      %s126 = sphi 0, %s126
      %s128 = sphi 0, %s126
      %s129 = sphi 0, %s128
      %s143 = sphi 0, %s129
      %s147 = sphi 0, %s147
      %s149 = sphi 0, %s147
      %s150 = sphi 0, %s149
      %s164 = sphi 0, %s150
      %s168 = sphi 0, %s168
      %s170 = sphi 0, %s168
      %s171 = sphi 0, %s170
      %s185 = sphi 0, %s171
      %s189 = sphi 0, %s189
      %s191 = sphi 0, %s189
      %s192 = sphi 0, %s191
      %s206 = sphi 0, %s192
      %s210 = sphi 0, %s210
      %s212 = sphi 0, %s210
      %s213 = sphi 0, %s212
      %s227 = sphi 0, %s213
      %s231 = sphi 0, %s231
      %s233 = sphi 0, %s231
      %s234 = sphi 0, %s233
      %s248 = sphi 0, %s234
      %s252 = sphi 0, %s252
      %s254 = sphi 0, %s252
      %s255 = sphi 0, %s254
      %s269 = sphi 0, %s255
      %s273 = sphi 0, %s273
      %s275 = sphi 0, %s273
      %s276 = sphi 0, %s275
      %s290 = sphi 0, %s276
      %s294 = sphi 0, %s294
      %s296 = sphi 0, %s294
      %s297 = sphi 0, %s296
      %s311 = sphi 0, %s297
      %s315 = sphi 0, %s315
      %s317 = sphi 0, %s315
      %s318 = sphi 0, %s317
      %s332 = sphi 0, %s318
      %s336 = sphi 0, %s336
      %s338 = sphi 0, %s336
      %s339 = sphi 0, %s338
      %s353 = sphi 0, %s339
      %s357 = sphi 0, %s357
      %s359 = sphi 0, %s357
      %s360 = sphi 0, %s359
      %s374 = sphi 0, %s360
      %s378 = sphi 0, %s378
      %s380 = sphi 0, %s378
      %s381 = sphi 0, %s380
      %s395 = sphi 0, %s381
      %s399 = sphi 0, %s399
      %s401 = sphi 0, %s399
      %s402 = sphi 0, %s401
      %s416 = sphi 0, %s402
      %s420 = sphi 0, %s420
      %s422 = sphi 0, %s420
      %s423 = sphi 0, %s422
      %s437 = sphi 0, %s423
      %s441 = sphi 0, %s441
      %s443 = sphi 0, %s441
      %s444 = sphi 0, %s443
      %s458 = sphi 0, %s444
      %s464 = sphi 0, %s466
      %s467 = sphi 0, %s464
      %s468 = sphi 0, %s467
      %s484 = sphi 0, %s468
    $region4: #{tpu_custom_call.1} parent=1 // loop_header_branch
      %32 = sbr.rel (%p30) target = $region8
    $region5: #{tpu_custom_call.1} parent=1 // loop_body
      %s34 = ssub.s32 %s29, 1
      %s35 = ssub.s32 %s29, 2
      %s36 = sadd.s32 %s29, 1
      %s37 = ssub.s32 %s29, %s36
      %p38 = scmp.eq.s32.totalorder %s37, 0
      %s40 = sadd.s32 %s39, 1
      %s41 = scalar_select %p38, %s39, %s40
      %p44 = pneg %p38
      %p45 = scmp.eq.s32.totalorder %s29, 1
      %p46 = por %p44, %p45
      %p47 = scmp.ne.s32.totalorder %s39, %s42
      %p48 = scmp.eq.s32.totalorder %s29, 0
      %p49 = por %p47, %p48
      %p50 = scmp.ne.s32.totalorder %s39, %s42
      %p51 = scmp.eq.s32.totalorder %s34, 1
      %p52 = por %p50, %p51
      %p53 = scmp.ne.s32.totalorder %s42, %s43
      %p54 = scmp.eq.s32.totalorder %s34, 0
      %p55 = por %p53, %p54
      %p56 = scmp.ne.s32.totalorder %s42, %s43
      %p57 = scmp.eq.s32.totalorder %s35, 1
      %p58 = por %p56, %p57
      %p60 = scmp.ne.s32.totalorder %s43, %s59
      %p61 = scmp.eq.s32.totalorder %s35, 0
      %p62 = por %p60, %p61
      %s64 = sadd.s32 %s63, 1
      %p67 = scmp.eq.s32.totalorder %s29, 1
      %p68 = scmp.ne.s32.totalorder %s63, %s65
      %p69 = scmp.eq.s32.totalorder %s29, 0
      %p70 = por %p68, %p69
      %p71 = scmp.ne.s32.totalorder %s63, %s65
      %p72 = scmp.eq.s32.totalorder %s34, 1
      %p73 = por %p71, %p72
      %p74 = scmp.ne.s32.totalorder %s65, %s66
      %p75 = scmp.eq.s32.totalorder %s34, 0
      %p76 = por %p74, %p75
      %p77 = scmp.ne.s32.totalorder %s65, %s66
      %p78 = scmp.eq.s32.totalorder %s35, 1
      %p79 = por %p77, %p78
      %p81 = scmp.ne.s32.totalorder %s66, %s80
      %p82 = scmp.eq.s32.totalorder %s35, 0
      %p83 = por %p81, %p82
      %s85 = sadd.s32 %s84, 1
      %p88 = scmp.eq.s32.totalorder %s29, 1
      %p89 = scmp.ne.s32.totalorder %s84, %s86
      %p90 = scmp.eq.s32.totalorder %s29, 0
      %p91 = por %p89, %p90
      %p92 = scmp.ne.s32.totalorder %s84, %s86
      %p93 = scmp.eq.s32.totalorder %s34, 1
      %p94 = por %p92, %p93
      %p95 = scmp.ne.s32.totalorder %s86, %s87
      %p96 = scmp.eq.s32.totalorder %s34, 0
      %p97 = por %p95, %p96
      %p98 = scmp.ne.s32.totalorder %s86, %s87
      %p99 = scmp.eq.s32.totalorder %s35, 1
      %p100 = por %p98, %p99
      %p102 = scmp.ne.s32.totalorder %s87, %s101
      %p103 = scmp.eq.s32.totalorder %s35, 0
      %p104 = por %p102, %p103
      %s106 = sadd.s32 %s105, 1
      %p109 = scmp.eq.s32.totalorder %s29, 1
      %p110 = scmp.ne.s32.totalorder %s105, %s107
      %p111 = scmp.eq.s32.totalorder %s29, 0
      %p112 = por %p110, %p111
      %p113 = scmp.ne.s32.totalorder %s105, %s107
      %p114 = scmp.eq.s32.totalorder %s34, 1
      %p115 = por %p113, %p114
      %p116 = scmp.ne.s32.totalorder %s107, %s108
      %p117 = scmp.eq.s32.totalorder %s34, 0
      %p118 = por %p116, %p117
      %p119 = scmp.ne.s32.totalorder %s107, %s108
      %p120 = scmp.eq.s32.totalorder %s35, 1
      %p121 = por %p119, %p120
      %p123 = scmp.ne.s32.totalorder %s108, %s122
      %p124 = scmp.eq.s32.totalorder %s35, 0
      %p125 = por %p123, %p124
      %s127 = sadd.s32 %s126, 1
      %p130 = scmp.eq.s32.totalorder %s29, 1
      %p131 = scmp.ne.s32.totalorder %s126, %s128
      %p132 = scmp.eq.s32.totalorder %s29, 0
      %p133 = por %p131, %p132
      %p134 = scmp.ne.s32.totalorder %s126, %s128
      %p135 = scmp.eq.s32.totalorder %s34, 1
      %p136 = por %p134, %p135
      %p137 = scmp.ne.s32.totalorder %s128, %s129
      %p138 = scmp.eq.s32.totalorder %s34, 0
      %p139 = por %p137, %p138
      %p140 = scmp.ne.s32.totalorder %s128, %s129
      %p141 = scmp.eq.s32.totalorder %s35, 1
      %p142 = por %p140, %p141
      %p144 = scmp.ne.s32.totalorder %s129, %s143
      %p145 = scmp.eq.s32.totalorder %s35, 0
      %p146 = por %p144, %p145
      %s148 = sadd.s32 %s147, 1
      %p151 = scmp.eq.s32.totalorder %s29, 1
      %p152 = scmp.ne.s32.totalorder %s147, %s149
      %p153 = scmp.eq.s32.totalorder %s29, 0
      %p154 = por %p152, %p153
      %p155 = scmp.ne.s32.totalorder %s147, %s149
      %p156 = scmp.eq.s32.totalorder %s34, 1
      %p157 = por %p155, %p156
      %p158 = scmp.ne.s32.totalorder %s149, %s150
      %p159 = scmp.eq.s32.totalorder %s34, 0
      %p160 = por %p158, %p159
      %p161 = scmp.ne.s32.totalorder %s149, %s150
      %p162 = scmp.eq.s32.totalorder %s35, 1
      %p163 = por %p161, %p162
      %p165 = scmp.ne.s32.totalorder %s150, %s164
      %p166 = scmp.eq.s32.totalorder %s35, 0
      %p167 = por %p165, %p166
      %s169 = sadd.s32 %s168, 1
      %p172 = scmp.eq.s32.totalorder %s29, 1
      %p173 = scmp.ne.s32.totalorder %s168, %s170
      %p174 = scmp.eq.s32.totalorder %s29, 0
      %p175 = por %p173, %p174
      %p176 = scmp.ne.s32.totalorder %s168, %s170
      %p177 = scmp.eq.s32.totalorder %s34, 1
      %p178 = por %p176, %p177
      %p179 = scmp.ne.s32.totalorder %s170, %s171
      %p180 = scmp.eq.s32.totalorder %s34, 0
      %p181 = por %p179, %p180
      %p182 = scmp.ne.s32.totalorder %s170, %s171
      %p183 = scmp.eq.s32.totalorder %s35, 1
      %p184 = por %p182, %p183
      %p186 = scmp.ne.s32.totalorder %s171, %s185
      %p187 = scmp.eq.s32.totalorder %s35, 0
      %p188 = por %p186, %p187
      %s190 = sadd.s32 %s189, 1
      %p193 = scmp.eq.s32.totalorder %s29, 1
      %p194 = scmp.ne.s32.totalorder %s189, %s191
      %p195 = scmp.eq.s32.totalorder %s29, 0
      %p196 = por %p194, %p195
      %p197 = scmp.ne.s32.totalorder %s189, %s191
      %p198 = scmp.eq.s32.totalorder %s34, 1
      %p199 = por %p197, %p198
      %p200 = scmp.ne.s32.totalorder %s191, %s192
      %p201 = scmp.eq.s32.totalorder %s34, 0
      %p202 = por %p200, %p201
      %p203 = scmp.ne.s32.totalorder %s191, %s192
      %p204 = scmp.eq.s32.totalorder %s35, 1
      %p205 = por %p203, %p204
      %p207 = scmp.ne.s32.totalorder %s192, %s206
      %p208 = scmp.eq.s32.totalorder %s35, 0
      %p209 = por %p207, %p208
      %s211 = sadd.s32 %s210, 1
      %p214 = scmp.eq.s32.totalorder %s29, 1
      %p215 = scmp.ne.s32.totalorder %s210, %s212
      %p216 = scmp.eq.s32.totalorder %s29, 0
      %p217 = por %p215, %p216
      %p218 = scmp.ne.s32.totalorder %s210, %s212
      %p219 = scmp.eq.s32.totalorder %s34, 1
      %p220 = por %p218, %p219
      %p221 = scmp.ne.s32.totalorder %s212, %s213
      %p222 = scmp.eq.s32.totalorder %s34, 0
      %p223 = por %p221, %p222
      %p224 = scmp.ne.s32.totalorder %s212, %s213
      %p225 = scmp.eq.s32.totalorder %s35, 1
      %p226 = por %p224, %p225
      %p228 = scmp.ne.s32.totalorder %s213, %s227
      %p229 = scmp.eq.s32.totalorder %s35, 0
      %p230 = por %p228, %p229
      %s232 = sadd.s32 %s231, 1
      %p235 = scmp.eq.s32.totalorder %s29, 1
      %p236 = scmp.ne.s32.totalorder %s231, %s233
      %p237 = scmp.eq.s32.totalorder %s29, 0
      %p238 = por %p236, %p237
      %p239 = scmp.ne.s32.totalorder %s231, %s233
      %p240 = scmp.eq.s32.totalorder %s34, 1
      %p241 = por %p239, %p240
      %p242 = scmp.ne.s32.totalorder %s233, %s234
      %p243 = scmp.eq.s32.totalorder %s34, 0
      %p244 = por %p242, %p243
      %p245 = scmp.ne.s32.totalorder %s233, %s234
      %p246 = scmp.eq.s32.totalorder %s35, 1
      %p247 = por %p245, %p246
      %p249 = scmp.ne.s32.totalorder %s234, %s248
      %p250 = scmp.eq.s32.totalorder %s35, 0
      %p251 = por %p249, %p250
      %s253 = sadd.s32 %s252, 1
      %p256 = scmp.eq.s32.totalorder %s29, 1
      %p257 = scmp.ne.s32.totalorder %s252, %s254
      %p258 = scmp.eq.s32.totalorder %s29, 0
      %p259 = por %p257, %p258
      %p260 = scmp.ne.s32.totalorder %s252, %s254
      %p261 = scmp.eq.s32.totalorder %s34, 1
      %p262 = por %p260, %p261
      %p263 = scmp.ne.s32.totalorder %s254, %s255
      %p264 = scmp.eq.s32.totalorder %s34, 0
      %p265 = por %p263, %p264
      %p266 = scmp.ne.s32.totalorder %s254, %s255
      %p267 = scmp.eq.s32.totalorder %s35, 1
      %p268 = por %p266, %p267
      %p270 = scmp.ne.s32.totalorder %s255, %s269
      %p271 = scmp.eq.s32.totalorder %s35, 0
      %p272 = por %p270, %p271
      %s274 = sadd.s32 %s273, 1
      %p277 = scmp.eq.s32.totalorder %s29, 1
      %p278 = scmp.ne.s32.totalorder %s273, %s275
      %p279 = scmp.eq.s32.totalorder %s29, 0
      %p280 = por %p278, %p279
      %p281 = scmp.ne.s32.totalorder %s273, %s275
      %p282 = scmp.eq.s32.totalorder %s34, 1
      %p283 = por %p281, %p282
      %p284 = scmp.ne.s32.totalorder %s275, %s276
      %p285 = scmp.eq.s32.totalorder %s34, 0
      %p286 = por %p284, %p285
      %p287 = scmp.ne.s32.totalorder %s275, %s276
      %p288 = scmp.eq.s32.totalorder %s35, 1
      %p289 = por %p287, %p288
      %p291 = scmp.ne.s32.totalorder %s276, %s290
      %p292 = scmp.eq.s32.totalorder %s35, 0
      %p293 = por %p291, %p292
      %s295 = sadd.s32 %s294, 1
      %p298 = scmp.eq.s32.totalorder %s29, 1
      %p299 = scmp.ne.s32.totalorder %s294, %s296
      %p300 = scmp.eq.s32.totalorder %s29, 0
      %p301 = por %p299, %p300
      %p302 = scmp.ne.s32.totalorder %s294, %s296
      %p303 = scmp.eq.s32.totalorder %s34, 1
      %p304 = por %p302, %p303
      %p305 = scmp.ne.s32.totalorder %s296, %s297
      %p306 = scmp.eq.s32.totalorder %s34, 0
      %p307 = por %p305, %p306
      %p308 = scmp.ne.s32.totalorder %s296, %s297
      %p309 = scmp.eq.s32.totalorder %s35, 1
      %p310 = por %p308, %p309
      %p312 = scmp.ne.s32.totalorder %s297, %s311
      %p313 = scmp.eq.s32.totalorder %s35, 0
      %p314 = por %p312, %p313
      %s316 = sadd.s32 %s315, 1
      %p319 = scmp.eq.s32.totalorder %s29, 1
      %p320 = scmp.ne.s32.totalorder %s315, %s317
      %p321 = scmp.eq.s32.totalorder %s29, 0
      %p322 = por %p320, %p321
      %p323 = scmp.ne.s32.totalorder %s315, %s317
      %p324 = scmp.eq.s32.totalorder %s34, 1
      %p325 = por %p323, %p324
      %p326 = scmp.ne.s32.totalorder %s317, %s318
      %p327 = scmp.eq.s32.totalorder %s34, 0
      %p328 = por %p326, %p327
      %p329 = scmp.ne.s32.totalorder %s317, %s318
      %p330 = scmp.eq.s32.totalorder %s35, 1
      %p331 = por %p329, %p330
      %p333 = scmp.ne.s32.totalorder %s318, %s332
      %p334 = scmp.eq.s32.totalorder %s35, 0
      %p335 = por %p333, %p334
      %s337 = sadd.s32 %s336, 1
      %p340 = scmp.eq.s32.totalorder %s29, 1
      %p341 = scmp.ne.s32.totalorder %s336, %s338
      %p342 = scmp.eq.s32.totalorder %s29, 0
      %p343 = por %p341, %p342
      %p344 = scmp.ne.s32.totalorder %s336, %s338
      %p345 = scmp.eq.s32.totalorder %s34, 1
      %p346 = por %p344, %p345
      %p347 = scmp.ne.s32.totalorder %s338, %s339
      %p348 = scmp.eq.s32.totalorder %s34, 0
      %p349 = por %p347, %p348
      %p350 = scmp.ne.s32.totalorder %s338, %s339
      %p351 = scmp.eq.s32.totalorder %s35, 1
      %p352 = por %p350, %p351
      %p354 = scmp.ne.s32.totalorder %s339, %s353
      %p355 = scmp.eq.s32.totalorder %s35, 0
      %p356 = por %p354, %p355
      %s358 = sadd.s32 %s357, 1
      %p361 = scmp.eq.s32.totalorder %s29, 1
      %p362 = scmp.ne.s32.totalorder %s357, %s359
      %p363 = scmp.eq.s32.totalorder %s29, 0
      %p364 = por %p362, %p363
      %p365 = scmp.ne.s32.totalorder %s357, %s359
      %p366 = scmp.eq.s32.totalorder %s34, 1
      %p367 = por %p365, %p366
      %p368 = scmp.ne.s32.totalorder %s359, %s360
      %p369 = scmp.eq.s32.totalorder %s34, 0
      %p370 = por %p368, %p369
      %p371 = scmp.ne.s32.totalorder %s359, %s360
      %p372 = scmp.eq.s32.totalorder %s35, 1
      %p373 = por %p371, %p372
      %p375 = scmp.ne.s32.totalorder %s360, %s374
      %p376 = scmp.eq.s32.totalorder %s35, 0
      %p377 = por %p375, %p376
      %s379 = sadd.s32 %s378, 1
      %p382 = scmp.eq.s32.totalorder %s29, 1
      %p383 = scmp.ne.s32.totalorder %s378, %s380
      %p384 = scmp.eq.s32.totalorder %s29, 0
      %p385 = por %p383, %p384
      %p386 = scmp.ne.s32.totalorder %s378, %s380
      %p387 = scmp.eq.s32.totalorder %s34, 1
      %p388 = por %p386, %p387
      %p389 = scmp.ne.s32.totalorder %s380, %s381
      %p390 = scmp.eq.s32.totalorder %s34, 0
      %p391 = por %p389, %p390
      %p392 = scmp.ne.s32.totalorder %s380, %s381
      %p393 = scmp.eq.s32.totalorder %s35, 1
      %p394 = por %p392, %p393
      %p396 = scmp.ne.s32.totalorder %s381, %s395
      %p397 = scmp.eq.s32.totalorder %s35, 0
      %p398 = por %p396, %p397
      %s400 = sadd.s32 %s399, 1
      %p403 = scmp.eq.s32.totalorder %s29, 1
      %p404 = scmp.ne.s32.totalorder %s399, %s401
      %p405 = scmp.eq.s32.totalorder %s29, 0
      %p406 = por %p404, %p405
      %p407 = scmp.ne.s32.totalorder %s399, %s401
      %p408 = scmp.eq.s32.totalorder %s34, 1
      %p409 = por %p407, %p408
      %p410 = scmp.ne.s32.totalorder %s401, %s402
      %p411 = scmp.eq.s32.totalorder %s34, 0
      %p412 = por %p410, %p411
      %p413 = scmp.ne.s32.totalorder %s401, %s402
      %p414 = scmp.eq.s32.totalorder %s35, 1
      %p415 = por %p413, %p414
      %p417 = scmp.ne.s32.totalorder %s402, %s416
      %p418 = scmp.eq.s32.totalorder %s35, 0
      %p419 = por %p417, %p418
      %s421 = sadd.s32 %s420, 1
      %p424 = scmp.eq.s32.totalorder %s29, 1
      %p425 = scmp.ne.s32.totalorder %s420, %s422
      %p426 = scmp.eq.s32.totalorder %s29, 0
      %p427 = por %p425, %p426
      %p428 = scmp.ne.s32.totalorder %s420, %s422
      %p429 = scmp.eq.s32.totalorder %s34, 1
      %p430 = por %p428, %p429
      %p431 = scmp.ne.s32.totalorder %s422, %s423
      %p432 = scmp.eq.s32.totalorder %s34, 0
      %p433 = por %p431, %p432
      %p434 = scmp.ne.s32.totalorder %s422, %s423
      %p435 = scmp.eq.s32.totalorder %s35, 1
      %p436 = por %p434, %p435
      %p438 = scmp.ne.s32.totalorder %s423, %s437
      %p439 = scmp.eq.s32.totalorder %s35, 0
      %p440 = por %p438, %p439
      %s442 = sadd.s32 %s441, 1
      %p445 = scmp.eq.s32.totalorder %s29, 1
      %p446 = scmp.ne.s32.totalorder %s441, %s443
      %p447 = scmp.eq.s32.totalorder %s29, 0
      %p448 = por %p446, %p447
      %p449 = scmp.ne.s32.totalorder %s441, %s443
      %p450 = scmp.eq.s32.totalorder %s34, 1
      %p451 = por %p449, %p450
      %p452 = scmp.ne.s32.totalorder %s443, %s444
      %p453 = scmp.eq.s32.totalorder %s34, 0
      %p454 = por %p452, %p453
      %p455 = scmp.ne.s32.totalorder %s443, %s444
      %p456 = scmp.eq.s32.totalorder %s35, 1
      %p457 = por %p455, %p456
      %p459 = scmp.ne.s32.totalorder %s444, %s458
      %p460 = scmp.eq.s32.totalorder %s35, 0
      %p461 = por %p459, %p460
      %s462 = ssub.s32 %s29, %s36
      %p463 = scmp.eq.s32.totalorder %s462, 0
      %s465 = sadd.s32 %s464, 1
      %s466 = scalar_select %p463, %s464, %s465
      %p469 = pneg %p463
      %p470 = scmp.eq.s32.totalorder %s29, 1
      %p471 = por %p469, %p470
      %p472 = scmp.ne.s32.totalorder %s464, %s467
      %p473 = scmp.eq.s32.totalorder %s29, 0
      %p474 = por %p472, %p473
      %p475 = scmp.ne.s32.totalorder %s464, %s467
      %p476 = scmp.eq.s32.totalorder %s34, 1
      %p477 = por %p475, %p476
      %p478 = scmp.ne.s32.totalorder %s467, %s468
      %p479 = scmp.eq.s32.totalorder %s34, 0
      %p480 = por %p478, %p479
      %p481 = scmp.ne.s32.totalorder %s467, %s468
      %p482 = scmp.eq.s32.totalorder %s35, 1
      %p483 = por %p481, %p482
      %p485 = scmp.ne.s32.totalorder %s468, %s484
      %p486 = scmp.eq.s32.totalorder %s35, 0
      %p487 = por %p485, %p486
      %p488 = scmp.le.s32.totalorder 1, %s29
      %p489 = scmp.lt.s32.totalorder %s29, 3
      %p490 = pnand %p488, %p489
      %p491 = pneg %p490
      // Predicated region
      $region9: #{tpu_custom_call.1} parent=5 // pred_check
        _
      $region10: #{tpu_custom_call.1} parent=5 // pred_check_branch
        %493 = sbr.rel (%p490) target = $region12
      $region11: #{tpu_custom_call.1} parent=5 // pred_region
        %s494 = ssub.s32 %s29, 1
        // Predicated region
        $region13: #{tpu_custom_call.1} parent=11 // pred_check
          %p495 = pneg %p76
        $region14: #{tpu_custom_call.1} parent=11 // pred_check_branch
          %497 = sbr.rel (%p495) target = $region16
        $region15: #{tpu_custom_call.1} parent=11 // pred_region
          _
        $region16: #{tpu_custom_call.1} parent=11 // pred_fallthru
          _
        // Predicated region
        $region17: #{tpu_custom_call.1} parent=11 // pred_check
          %p498 = pneg %p97
        $region18: #{tpu_custom_call.1} parent=11 // pred_check_branch
          %500 = sbr.rel (%p498) target = $region20
        $region19: #{tpu_custom_call.1} parent=11 // pred_region
          _
        $region20: #{tpu_custom_call.1} parent=11 // pred_fallthru
          _
        // Predicated region
        $region21: #{tpu_custom_call.1} parent=11 // pred_check
          %p501 = pneg %p118
        $region22: #{tpu_custom_call.1} parent=11 // pred_check_branch
          %503 = sbr.rel (%p501) target = $region24
        $region23: #{tpu_custom_call.1} parent=11 // pred_region
          _
        $region24: #{tpu_custom_call.1} parent=11 // pred_fallthru
          _
        // Predicated region
        $region25: #{tpu_custom_call.1} parent=11 // pred_check
          %p504 = pneg %p139
        $region26: #{tpu_custom_call.1} parent=11 // pred_check_branch
          %506 = sbr.rel (%p504) target = $region28
        $region27: #{tpu_custom_call.1} parent=11 // pred_region
          _
        $region28: #{tpu_custom_call.1} parent=11 // pred_fallthru
          _
        // Predicated region
        $region29: #{tpu_custom_call.1} parent=11 // pred_check
          %p507 = pneg %p160
        $region30: #{tpu_custom_call.1} parent=11 // pred_check_branch
          %509 = sbr.rel (%p507) target = $region32
        $region31: #{tpu_custom_call.1} parent=11 // pred_region
          _
        $region32: #{tpu_custom_call.1} parent=11 // pred_fallthru
          _
        // Predicated region
        $region33: #{tpu_custom_call.1} parent=11 // pred_check
          %p510 = pneg %p181
        $region34: #{tpu_custom_call.1} parent=11 // pred_check_branch
          %512 = sbr.rel (%p510) target = $region36
        $region35: #{tpu_custom_call.1} parent=11 // pred_region
          _
        $region36: #{tpu_custom_call.1} parent=11 // pred_fallthru
          _
        // Predicated region
        $region37: #{tpu_custom_call.1} parent=11 // pred_check
          %p513 = pneg %p202
        $region38: #{tpu_custom_call.1} parent=11 // pred_check_branch
          %515 = sbr.rel (%p513) target = $region40
        $region39: #{tpu_custom_call.1} parent=11 // pred_region
          _
        $region40: #{tpu_custom_call.1} parent=11 // pred_fallthru
          _
        // Predicated region
        $region41: #{tpu_custom_call.1} parent=11 // pred_check
          %p516 = pneg %p223
        $region42: #{tpu_custom_call.1} parent=11 // pred_check_branch
          %518 = sbr.rel (%p516) target = $region44
        $region43: #{tpu_custom_call.1} parent=11 // pred_region
          _
        $region44: #{tpu_custom_call.1} parent=11 // pred_fallthru
          _
        // Predicated region
        $region45: #{tpu_custom_call.1} parent=11 // pred_check
          %p519 = pneg %p244
        $region46: #{tpu_custom_call.1} parent=11 // pred_check_branch
          %521 = sbr.rel (%p519) target = $region48
        $region47: #{tpu_custom_call.1} parent=11 // pred_region
          _
        $region48: #{tpu_custom_call.1} parent=11 // pred_fallthru
          _
        // Predicated region
        $region49: #{tpu_custom_call.1} parent=11 // pred_check
          %p522 = pneg %p265
        $region50: #{tpu_custom_call.1} parent=11 // pred_check_branch
          %524 = sbr.rel (%p522) target = $region52
        $region51: #{tpu_custom_call.1} parent=11 // pred_region
          _
        $region52: #{tpu_custom_call.1} parent=11 // pred_fallthru
          _
        // Predicated region
        $region53: #{tpu_custom_call.1} parent=11 // pred_check
          %p525 = pneg %p286
        $region54: #{tpu_custom_call.1} parent=11 // pred_check_branch
          %527 = sbr.rel (%p525) target = $region56
        $region55: #{tpu_custom_call.1} parent=11 // pred_region
          _
        $region56: #{tpu_custom_call.1} parent=11 // pred_fallthru
          _
        // Predicated region
        $region57: #{tpu_custom_call.1} parent=11 // pred_check
          %p528 = pneg %p307
        $region58: #{tpu_custom_call.1} parent=11 // pred_check_branch
          %530 = sbr.rel (%p528) target = $region60
        $region59: #{tpu_custom_call.1} parent=11 // pred_region
          _
        $region60: #{tpu_custom_call.1} parent=11 // pred_fallthru
          _
        // Predicated region
        $region61: #{tpu_custom_call.1} parent=11 // pred_check
          %p531 = pneg %p328
        $region62: #{tpu_custom_call.1} parent=11 // pred_check_branch
          %533 = sbr.rel (%p531) target = $region64
        $region63: #{tpu_custom_call.1} parent=11 // pred_region
          _
        $region64: #{tpu_custom_call.1} parent=11 // pred_fallthru
          _
        // Predicated region
        $region65: #{tpu_custom_call.1} parent=11 // pred_check
          %p534 = pneg %p349
        $region66: #{tpu_custom_call.1} parent=11 // pred_check_branch
          %536 = sbr.rel (%p534) target = $region68
        $region67: #{tpu_custom_call.1} parent=11 // pred_region
          _
        $region68: #{tpu_custom_call.1} parent=11 // pred_fallthru
          _
        // Predicated region
        $region69: #{tpu_custom_call.1} parent=11 // pred_check
          %p537 = pneg %p370
        $region70: #{tpu_custom_call.1} parent=11 // pred_check_branch
          %539 = sbr.rel (%p537) target = $region72
        $region71: #{tpu_custom_call.1} parent=11 // pred_region
          _
        $region72: #{tpu_custom_call.1} parent=11 // pred_fallthru
          _
        // Predicated region
        $region73: #{tpu_custom_call.1} parent=11 // pred_check
          %p540 = pneg %p391
        $region74: #{tpu_custom_call.1} parent=11 // pred_check_branch
          %542 = sbr.rel (%p540) target = $region76
        $region75: #{tpu_custom_call.1} parent=11 // pred_region
          _
        $region76: #{tpu_custom_call.1} parent=11 // pred_fallthru
          _
        // Predicated region
        $region77: #{tpu_custom_call.1} parent=11 // pred_check
          %p543 = pneg %p412
        $region78: #{tpu_custom_call.1} parent=11 // pred_check_branch
          %545 = sbr.rel (%p543) target = $region80
        $region79: #{tpu_custom_call.1} parent=11 // pred_region
          _
        $region80: #{tpu_custom_call.1} parent=11 // pred_fallthru
          _
        // Predicated region
        $region81: #{tpu_custom_call.1} parent=11 // pred_check
          %p546 = pneg %p433
        $region82: #{tpu_custom_call.1} parent=11 // pred_check_branch
          %548 = sbr.rel (%p546) target = $region84
        $region83: #{tpu_custom_call.1} parent=11 // pred_region
          _
        $region84: #{tpu_custom_call.1} parent=11 // pred_fallthru
          _
        // Predicated region
        $region85: #{tpu_custom_call.1} parent=11 // pred_check
          %p549 = pneg %p454
        $region86: #{tpu_custom_call.1} parent=11 // pred_check_branch
          %551 = sbr.rel (%p549) target = $region88
        $region87: #{tpu_custom_call.1} parent=11 // pred_region
          _
        $region88: #{tpu_custom_call.1} parent=11 // pred_fallthru
          _
      $region12: #{tpu_custom_call.1} parent=5 // pred_fallthru
        _
      %p552 = scmp.lt.s32.totalorder %s29, 2
      // Predicated region
      $region89: #{tpu_custom_call.1} parent=5 // pred_check
        %p553 = pneg %p552
      $region90: #{tpu_custom_call.1} parent=5 // pred_check_branch
        %555 = sbr.rel (%p553) target = $region92
      $region91: #{tpu_custom_call.1} parent=5 // pred_region
        // Predicated region
        $region93: #{tpu_custom_call.1} parent=91 // pred_check
          %p556 = pneg %p49
        $region94: #{tpu_custom_call.1} parent=91 // pred_check_branch
          %558 = sbr.rel (%p556) target = $region96
        $region95: #{tpu_custom_call.1} parent=91 // pred_region
          %p559 = scmp.lt.s32.totalorder %s29, 1
          %s560 = scalar_select %p559, %s29, 1
          %s561 = smul.addr %s560, 2
          %s562 = smul.addr %s561, 8
          %s563 = scalar_lea.vmem %s0, %s562
        $region96: #{tpu_custom_call.1} parent=91 // pred_fallthru
          _
      $region92: #{tpu_custom_call.1} parent=5 // pred_fallthru
        _
      %p564 = scmp.le.s32.totalorder 1, %s29
      %p565 = scmp.lt.s32.totalorder %s29, 3
      %p566 = pnand %p564, %p565
      %p567 = pneg %p566
      // Predicated region
      $region97: #{tpu_custom_call.1} parent=5 // pred_check
        _
      $region98: #{tpu_custom_call.1} parent=5 // pred_check_branch
        %569 = sbr.rel (%p566) target = $region100
      $region99: #{tpu_custom_call.1} parent=5 // pred_region
        %s570 = ssub.s32 %s29, 1
        %p571 = scmp.lt.s32.totalorder %s34, 1
        %s572 = scalar_select %p571, %s34, 1
        %s573 = smul.addr %s572, 2
        %s574 = smul.addr %s573, 8
        %s575 = scalar_lea.vmem %s0, %s574
        %p576 = pneg %p55
        %p577 = pneg %p52
        %p578 = pneg %p76
        %p579 = pneg %p73
        %p580 = pneg %p97
        %p581 = pneg %p94
        %p582 = pneg %p118
        %p583 = pneg %p115
        %p584 = pneg %p139
        %p585 = pneg %p136
        %p586 = pneg %p160
        %p587 = pneg %p157
        %p588 = pneg %p181
        %p589 = pneg %p178
        %p590 = pneg %p202
        %p591 = pneg %p199
        %p592 = pneg %p223
        %p593 = pneg %p220
        %p594 = pneg %p244
        %p595 = pneg %p241
        %p596 = pneg %p265
        %p597 = pneg %p262
        %p598 = pneg %p286
        %p599 = pneg %p283
        %p600 = pneg %p307
        %p601 = pneg %p304
        %p602 = pneg %p328
        %p603 = pneg %p325
        %p604 = pneg %p349
        %p605 = pneg %p346
        %p606 = pneg %p370
        %p607 = pneg %p367
        %p608 = pneg %p391
        %p609 = pneg %p388
        %p610 = pneg %p412
        %p611 = pneg %p409
        %p612 = pneg %p433
        %p613 = pneg %p430
        %p614 = pneg %p454
        %p615 = pneg %p451
        %p616 = pneg %p480
        %p617 = pneg %p477
        %s618 = sand.u32 %s467, 1
        %s619 = scalar_lea.sflag [#allocation3], %s618
        %s620 = sand.u32 %s467, 1
        %s621 = scalar_lea.vmem [#allocation2], %s620
        %p622 = scmp.lt.s32.totalorder %s34, 1
        %s623 = scalar_select %p622, %s34, 1
        %s624 = smul.addr %s623, 2
        %s625 = smul.addr %s624, 8
        %s626 = scalar_lea.vmem %s0, %s625
        %v627 = vld [vmem:[%s626] sm:$0xff]
        %v628 = vld [vmem:[%s626 + $0x8] sm:$0xff]
        %v629 = vld [vmem:[%s4] sm:$0xff]
        %v630 = vld [vmem:[%s5] sm:$0x1]
        %v632 = vperm.slane %v630, 0
        %vm634 = vcmask 64512
        %v636 = vsel %vm634, %v627, 0
        %v639 = vsel %vm634, %v628, 0
        %641 = vmatpush.msra.mxu0 0.0
        %642 = vmatpush.msra.mxu0 0.0
        %643 = vmatpush.msra.mxu0 0.0
        %644 = vmatpush.msra.mxu0 0.0
        %645 = vmatpush.msra.mxu0 0.0
        %646 = vmatpush.msra.mxu0 0.0
        %647 = vmatpush.msra.mxu0 0.0
        %648 = vmatpush.msra.mxu0 0.0
        %649 = vmatpush.msra.mxu0 0.0
        %650 = vmatpush.msra.mxu0 0.0
        %651 = vmatpush.msra.mxu0 0.0
        %652 = vmatpush.msra.mxu0 0.0
        %653 = vmatpush.msra.mxu0 0.0
        %654 = vmatpush.msra.mxu0 0.0
        %655 = vmatpush.msra.mxu0 0.0
        %656 = vmatpush.msra.mxu0 %v629
        %657 = vmatmul.f32.gmra.mxu0 %v636
        %v658 = vpop.f32.mrf.mxu0
        %v659 = vadd.f32 %v632, %v658
        %660 = vmatmul.f32.gmra.mxu0 %v639
        %v661 = vpop.f32.mrf.mxu0
        %v662 = vadd.f32 %v632, %v661
        %663 = vdwg.mxu0
        %v664 = vld [vmem:[%s6] sm:$0x1]
        %v665 = vld [vmem:[%s7] sm:$0x1]
        %vm666 = vcmask 261120
        %v667 = vsel %vm666, %v659, 0.0
        %668 = vadd.xlane.f32.xlu0 %v667
        %v669 = vpop.xlane.xlu0 %668
        %v670 = vsel %vm666, %v662, 0.0
        %671 = vadd.xlane.f32.xlu0 %v670
        %v672 = vpop.xlane.xlu0 %671
        %v673 = vrcp.pop 32.0
        %v674 = vmul.f32 32.0, %v673
        %v675 = vsub.f32 1.0, %v674
        %v676 = vmul.f32 %v673, %v675
        %v677 = vadd.f32 %v673, %v676
        %vm678 = vweird.f32 %v673
        %v679 = vsel %vm678, %v673, %v677
        %v680 = vmul.f32 %v669, %v679
        %v681 = vmul.f32 %v672, %v679
        %v682 = vsub.f32 %v659, %v680
        %v683 = vsub.f32 %v662, %v681
        %v684 = vmul.f32 %v682, %v682
        %v685 = vmul.f32 %v683, %v683
        %v686 = vsel %vm666, %v684, 0.0
        %687 = vadd.xlane.f32.xlu0 %v686
        %v688 = vpop.xlane.xlu0 %687
        %v689 = vsel %vm666, %v685, 0.0
        %690 = vadd.xlane.f32.xlu0 %v689
        %v691 = vpop.xlane.xlu0 %690
        %v692 = vmul.f32 %v688, %v679
        %v693 = vmul.f32 %v691, %v679
        %v694 = vadd.f32 %v692, 1e-05
        %v695 = vadd.f32 %v693, 1e-05
        %v696 = vrsqrt.pop %v694
        %v697 = vmul.f32 %v696, %v694
        %v698 = vmul.f32 %v697, %v696
        %v699 = vmul.f32 0.5, %v698
        %v700 = vsub.f32 1.5, %v699
        %v701 = vmul.f32 %v696, %v700
        %vm702 = vweird.f32 %v694
        %vm703 = vweird.f32 %v696
        %vm704 = vmor %vm702, %vm703
        %v705 = vsel %vm704, %v696, %v701
        %v706 = vrsqrt.pop %v695
        %v707 = vmul.f32 %v706, %v695
        %v708 = vmul.f32 %v707, %v706
        %v709 = vmul.f32 0.5, %v708
        %v710 = vsub.f32 1.5, %v709
        %v711 = vmul.f32 %v706, %v710
        %vm712 = vweird.f32 %v695
        %vm713 = vweird.f32 %v706
        %vm714 = vmor %vm712, %vm713
        %v715 = vsel %vm714, %v706, %v711
        %v716 = vmul.f32 %v682, %v705
        %v717 = vmul.f32 %v683, %v715
        %v719 = vperm.slane %v664, 0
        %v721 = vmul.f32 %v716, %v719
        %v722 = vmul.f32 %v717, %v719
        %v724 = vperm.slane %v665, 0
        %v726 = vadd.f32 %v721, %v724
        %v727 = vadd.f32 %v722, %v724
        %v728 = vld [vmem:[%s8] sm:$0xff]
        %v729 = vld [vmem:[%s8 + $0x8] sm:$0xff]
        %v730 = vld [vmem:[%s8 + $0x10] sm:$0xff]
        %v731 = vld [vmem:[%s8 + $0x18] sm:$0xff]
        %v733 = vsel %vm666, %v726, 0
        %v736 = vsel %vm666, %v727, 0
        %738 = vmatpush.msra.mxu0 0.0
        %739 = vmatpush.msra.mxu0 0.0
        %740 = vmatpush.msra.mxu0 0.0
        %741 = vmatpush.msra.mxu0 0.0
        %742 = vmatpush.msra.mxu0 0.0
        %743 = vmatpush.msra.mxu0 0.0
        %744 = vmatpush.msra.mxu0 0.0
        %745 = vmatpush.msra.mxu0 0.0
        %746 = vmatpush.msra.mxu0 0.0
        %747 = vmatpush.msra.mxu0 0.0
        %748 = vmatpush.msra.mxu0 0.0
        %749 = vmatpush.msra.mxu0 0.0
        %750 = vmatpush.msra.mxu0 %v731
        %751 = vmatpush.msra.mxu0 %v730
        %752 = vmatpush.msra.mxu0 %v729
        %753 = vmatpush.msra.mxu0 %v728
        %754 = vmatmul.f32.gmra.mxu0 %v733
        %v755 = vpop.f32.mrf.mxu0
        %v756 = vadd.f32 0.0, %v755
        %757 = vmatmul.f32.gmra.mxu0 %v736
        %v758 = vpop.f32.mrf.mxu0
        %v759 = vadd.f32 0.0, %v758
        %760 = vdwg.mxu0
        %v761 = vld [vmem:[%s9] sm:$0x1]
        %v762 = vld [vmem:[%s9 + $0x1] sm:$0x1]
        %v763 = vld [vmem:[%s9 + $0x2] sm:$0x1]
        %v764 = vrot.slane %v756, 7
        %v765 = vrot.slane %v759, 7
        %v766 = vlaneseq
        %v767 = vshrl.u32 %v766, 7
        %vm768 = vcmp.lt.s32.totalorder %v767, 1
        %v769 = vsel %vm768, %v764, %v765
        %v770 = vsel %vm768, %v765, %v764
        %v771 = vld [vmem:[%s2] sm:$0xff]
        %v772 = vld [vmem:[%s2 + $0x8] sm:$0xff]
        %774 = vset.pattern.permute.xlu0 0
        %775 = vperm.xlu0 %774, %v771
        %v776 = vpop.permute.xlu0 %775
        %779 = vset.pattern.permute.xlu0 0
        %780 = vperm.xlu0 %779, %v772
        %v781 = vpop.permute.xlu0 %780
        %v783 = vmul.f32 %v770, %v776
        %v784 = vmul.f32 %v769, %v781
        %v785 = vrot.slane %v756, 1
        %v786 = vrot.slane %v759, 1
        %vm787 = vcmp.lt.s32.totalorder %v767, 7
        %v788 = vsel %vm787, %v785, %v786
        %v789 = vsel %vm787, %v786, %v785
        %v790 = vld [vmem:[%s3] sm:$0xff]
        %v791 = vld [vmem:[%s3 + $0x8] sm:$0xff]
        %793 = vset.pattern.permute.xlu0 0
        %794 = vperm.xlu0 %793, %v790
        %v795 = vpop.permute.xlu0 %794
        %798 = vset.pattern.permute.xlu0 0
        %799 = vperm.xlu0 %798, %v791
        %v800 = vpop.permute.xlu0 %799
        %v802 = vmul.f32 %v788, %v795
        %v803 = vmul.f32 %v789, %v800
        %v804 = vperm.slane %v761, 0
        %v805 = vmul.f32 %v783, %v804
        %v806 = vmul.f32 %v784, %v804
        %v807 = vperm.slane %v762, 0
        %v808 = vmul.f32 %v756, %v807
        %v809 = vmul.f32 %v759, %v807
        %v810 = vadd.f32 %v805, %v808
        %v811 = vadd.f32 %v806, %v809
        %v812 = vperm.slane %v763, 0
        %v813 = vmul.f32 %v802, %v812
        %v814 = vmul.f32 %v803, %v812
        %v815 = vadd.f32 %v810, %v813
        %v816 = vadd.f32 %v811, %v814
        %v817 = vmul.f32 %v815, 0.5
        %v818 = vmul.f32 %v816, 0.5
        %v819 = vtanh.pop %v817
        %v820 = vtanh.pop %v818
        %v821 = vadd.f32 %v819, 1.0
        %v822 = vadd.f32 %v820, 1.0
        %v823 = vmul.f32 %v821, 0.5
        %v824 = vmul.f32 %v822, 0.5
        %v825 = vmul.f32 %v815, %v823
        %v826 = vmul.f32 %v816, %v824
        %v827 = vld [vmem:[%s10] sm:$0xff]
        %v828 = vld [vmem:[%s10 + $0x8] sm:$0xff]
        %v829 = vld [vmem:[%s10 + $0x10] sm:$0xff]
        %v830 = vld [vmem:[%s10 + $0x18] sm:$0xff]
        %v831 = vld [vmem:[%s10 + $0x20] sm:$0xff]
        %v832 = vld [vmem:[%s10 + $0x28] sm:$0xff]
        %v833 = vld [vmem:[%s10 + $0x30] sm:$0xff]
        %v834 = vld [vmem:[%s10 + $0x38] sm:$0xff]
        %v835 = vld [vmem:[%s11] sm:$0x1]
        %v837 = vperm.slane %v835, 0
        %vm839 = vcmask 523264
        %v841 = vsel %vm839, %v825, 0
        %v844 = vsel %vm839, %v826, 0
        %846 = vmatpush.msra.mxu0 0.0
        %847 = vmatpush.msra.mxu0 0.0
        %848 = vmatpush.msra.mxu0 0.0
        %849 = vmatpush.msra.mxu0 0.0
        %850 = vmatpush.msra.mxu0 0.0
        %851 = vmatpush.msra.mxu0 0.0
        %852 = vmatpush.msra.mxu0 0.0
        %853 = vmatpush.msra.mxu0 0.0
        %854 = vmatpush.msra.mxu0 %v834
        %855 = vmatpush.msra.mxu0 %v833
        %856 = vmatpush.msra.mxu0 %v832
        %857 = vmatpush.msra.mxu0 %v831
        %858 = vmatpush.msra.mxu0 %v830
        %859 = vmatpush.msra.mxu0 %v829
        %860 = vmatpush.msra.mxu0 %v828
        %861 = vmatpush.msra.mxu0 %v827
        %862 = vmatmul.f32.gmra.mxu0 %v841
        %v863 = vpop.f32.mrf.mxu0
        %v864 = vadd.f32 %v837, %v863
        %865 = vmatmul.f32.gmra.mxu0 %v844
        %v866 = vpop.f32.mrf.mxu0
        %v867 = vadd.f32 %v837, %v866
        %868 = vdwg.mxu0
        %v869 = vmax.f32 %v864, 0.0
        %v870 = vmax.f32 %v867, 0.0
        %v871 = vand.u32 2147483647, %v864
        %v872 = vand.u32 2147483647, %v867
        %v873 = vsub.f32 0.0, %v871
        %v874 = vsub.f32 0.0, %v872
        %v875 = vmul.f32 %v873, 1.442695
        %v876 = vpow.pop %v875
        %v877 = vmul.f32 %v874, 1.442695
        %v878 = vpow.pop %v877
        %v879 = vadd.f32 %v876, 1.0
        %v880 = vadd.f32 %v878, 1.0
        %v881 = vlog2.pop %v879
        %v882 = vmul.f32 %v881, 0.6931472
        %v883 = vlog2.pop %v880
        %v884 = vmul.f32 %v883, 0.6931472
        %v885 = vadd.f32 %v869, %v882
        %v886 = vadd.f32 %v870, %v884
        %v887 = vmul.f32 %v885, 0.5
        %v888 = vmul.f32 %v886, 0.5
        %v889 = vtanh.pop %v887
        %v890 = vtanh.pop %v888
        %v891 = vadd.f32 %v889, 1.0
        %v892 = vadd.f32 %v890, 1.0
        %v893 = vmul.f32 %v891, 0.5
        %v894 = vmul.f32 %v892, 0.5
        %v895 = vmul.f32 %v825, %v893
        %v896 = vmul.f32 %v826, %v894
        %v897 = vmul.f32 %v756, 0.5
        %v898 = vmul.f32 %v759, 0.5
        %v899 = vtanh.pop %v897
        %v900 = vtanh.pop %v898
        %v901 = vadd.f32 %v899, 1.0
        %v902 = vadd.f32 %v900, 1.0
        %v903 = vmul.f32 %v901, 0.5
        %v904 = vmul.f32 %v902, 0.5
        %907 = vrot.lane.b32.xlu0 %v903, 64
        %v908 = vpop.permute.xlu0 %907
        %909 = vrot.lane.b32.xlu0 %v904, 64
        %v910 = vpop.permute.xlu0 %909
        %v913 = vmul.f32 %v895, %v908
        %v914 = vmul.f32 %v896, %v910
        %v915 = vld [vmem:[%s12] sm:$0xff]
        %v916 = vld [vmem:[%s12 + $0x8] sm:$0xff]
        %v917 = vld [vmem:[%s12 + $0x10] sm:$0xff]
        %v918 = vld [vmem:[%s12 + $0x18] sm:$0xff]
        %v919 = vld [vmem:[%s12 + $0x20] sm:$0xff]
        %v920 = vld [vmem:[%s12 + $0x28] sm:$0xff]
        %v921 = vld [vmem:[%s12 + $0x30] sm:$0xff]
        %v922 = vld [vmem:[%s12 + $0x38] sm:$0xff]
        %v924 = vsel %vm839, %v913, 0
        %v927 = vsel %vm839, %v914, 0
        %929 = vmatpush.msra.mxu0 0.0
        %930 = vmatpush.msra.mxu0 0.0
        %931 = vmatpush.msra.mxu0 0.0
        %932 = vmatpush.msra.mxu0 0.0
        %933 = vmatpush.msra.mxu0 0.0
        %934 = vmatpush.msra.mxu0 0.0
        %935 = vmatpush.msra.mxu0 0.0
        %936 = vmatpush.msra.mxu0 0.0
        %937 = vmatpush.msra.mxu0 %v922
        %938 = vmatpush.msra.mxu0 %v921
        %939 = vmatpush.msra.mxu0 %v920
        %940 = vmatpush.msra.mxu0 %v919
        %941 = vmatpush.msra.mxu0 %v918
        %942 = vmatpush.msra.mxu0 %v917
        %943 = vmatpush.msra.mxu0 %v916
        %944 = vmatpush.msra.mxu0 %v915
        %945 = vmatmul.f32.gmra.mxu0 %v924
        %v946 = vpop.f32.mrf.mxu0
        %v947 = vadd.f32 0.0, %v946
        %948 = vmatmul.f32.gmra.mxu0 %v927
        %v949 = vpop.f32.mrf.mxu0
        %v950 = vadd.f32 0.0, %v949
        %951 = vdwg.mxu0
        %v952 = vld [vmem:[%s13] sm:$0x1]
        %v954 = vperm.slane %v952, 0
        %v956 = vmul.f32 %v947, %v954
        %v957 = vmul.f32 %v950, %v954
        %v958 = vadd.f32 %v956, %v659
        %v959 = vadd.f32 %v957, %v662
        %v960 = vld [vmem:[%s1] sm:$0x1]
        %vm961 = vcmask 130048
        %v963 = vsel %vm961, %v960, 0
        %965 = vmatpush.msra.mxu0 0.0
        %966 = vmatpush.msra.mxu0 0.0
        %967 = vmatpush.msra.mxu0 0.0
        %968 = vmatpush.msra.mxu0 0.0
        %969 = vmatpush.msra.mxu0 0.0
        %970 = vmatpush.msra.mxu0 0.0
        %971 = vmatpush.msra.mxu0 0.0
        %972 = vmatpush.msra.mxu0 0.0
        %973 = vmatpush.msra.mxu0 0.0
        %974 = vmatpush.msra.mxu0 0.0
        %975 = vmatpush.msra.mxu0 0.0
        %976 = vmatpush.msra.mxu0 0.0
        %977 = vmatpush.msra.mxu0 0.0
        %978 = vmatpush.msra.mxu0 0.0
        %979 = vmatpush.msra.mxu0 %v959
        %980 = vmatpush.msra.mxu0 %v958
        %981 = vmatmul.f32.gmra.mxu0 %v963
        %v982 = vpop.f32.mrf.mxu0
        %v983 = vadd.f32 0.0, %v982
        %984 = vdwg.mxu0
        %v985 = vld [vmem:[%s14] sm:$0xff]
        %v986 = vld [vmem:[%s14 + $0x8] sm:$0xff]
        %v987 = vld [vmem:[%s14 + $0x10] sm:$0xff]
        %v988 = vld [vmem:[%s14 + $0x18] sm:$0xff]
        %v989 = vld [vmem:[%s15] sm:$0x1]
        %v991 = vsel %vm666, %v983, 0
        %993 = vmatpush.msra.mxu0 0.0
        %994 = vmatpush.msra.mxu0 0.0
        %995 = vmatpush.msra.mxu0 0.0
        %996 = vmatpush.msra.mxu0 0.0
        %997 = vmatpush.msra.mxu0 0.0
        %998 = vmatpush.msra.mxu0 0.0
        %999 = vmatpush.msra.mxu0 0.0
        %1000 = vmatpush.msra.mxu0 0.0
        %1001 = vmatpush.msra.mxu0 0.0
        %1002 = vmatpush.msra.mxu0 0.0
        %1003 = vmatpush.msra.mxu0 0.0
        %1004 = vmatpush.msra.mxu0 0.0
        %1005 = vmatpush.msra.mxu0 %v988
        %1006 = vmatpush.msra.mxu0 %v987
        %1007 = vmatpush.msra.mxu0 %v986
        %1008 = vmatpush.msra.mxu0 %v985
        %1009 = vmatmul.f32.gmra.mxu0 %v991
        %v1010 = vpop.f32.mrf.mxu0
        %v1011 = vadd.f32 %v989, %v1010
        %1012 = vdwg.mxu0
        %v1013 = vmul.f32 %v1011, 0.5
        %v1014 = vmul.f32 %v1011, 0.70710677
        %vm1015 = vcmp.ge.f32.partialorder %v1014, 0.0
        %v1016 = vsel %vm1015, 1.0, -1.0
        %v1017 = vand.u32 2147483647, %v1014
        %v1018 = vmul.f32 %v1017, 0.3275911
        %v1019 = vadd.f32 %v1018, 1.0
        %v1020 = vrcp.pop %v1019
        %v1021 = vmul.f32 %v1019, %v1020
        %v1022 = vsub.f32 1.0, %v1021
        %v1023 = vmul.f32 %v1020, %v1022
        %v1024 = vadd.f32 %v1020, %v1023
        %vm1025 = vweird.f32 %v1019
        %vm1026 = vweird.f32 %v1020
        %vm1027 = vmor %vm1025, %vm1026
        %v1028 = vsel %vm1027, %v1020, %v1024
        %v1029 = vand.u32 2147483647, %v1019
        %vm1030 = vcmp.eq.f32.partialorder %v1029, 8.507059e+37
        %v1031 = vand.u32 %v1019, 2147483648
        %v1032 = vor.u32 1.1754944e-38, %v1031
        %v1033 = vsel %vm1030, %v1032, %v1028
        %v1034 = vmul.f32 1.0, %v1033
        %v1035 = vmul.f32 %v1034, 1.0614054
        %v1036 = vadd.f32 %v1035, -1.4531521
        %v1037 = vmul.f32 %v1036, %v1034
        %v1038 = vadd.f32 %v1037, 1.4214138
        %v1039 = vmul.f32 %v1038, %v1034
        %v1040 = vadd.f32 %v1039, -0.28449672
        %v1041 = vmul.f32 %v1040, %v1034
        %v1042 = vadd.f32 %v1041, 0.2548296
        %v1043 = vmul.f32 %v1042, %v1034
        %v1044 = vsub.f32 0.0, %v1017
        %v1045 = vmul.f32 %v1044, %v1017
        %v1046 = vmul.f32 %v1045, 1.442695
        %v1047 = vpow.pop %v1046
        %v1048 = vmul.f32 %v1043, %v1047
        %v1049 = vsub.f32 1.0, %v1048
        %v1050 = vmul.f32 %v1016, %v1049
        %v1051 = vadd.f32 %v1050, 1.0
        %v1052 = vmul.f32 %v1013, %v1051
        %v1053 = vld [vmem:[%s16] sm:$0xff]
        %v1054 = vld [vmem:[%s16 + $0x8] sm:$0xff]
        %v1055 = vld [vmem:[%s16 + $0x10] sm:$0xff]
        %v1056 = vld [vmem:[%s16 + $0x18] sm:$0xff]
        %v1057 = vld [vmem:[%s17] sm:$0x1]
        %v1059 = vsel %vm666, %v1052, 0
        %1061 = vmatpush.msra.mxu0 0.0
        %1062 = vmatpush.msra.mxu0 0.0
        %1063 = vmatpush.msra.mxu0 0.0
        %1064 = vmatpush.msra.mxu0 0.0
        %1065 = vmatpush.msra.mxu0 0.0
        %1066 = vmatpush.msra.mxu0 0.0
        %1067 = vmatpush.msra.mxu0 0.0
        %1068 = vmatpush.msra.mxu0 0.0
        %1069 = vmatpush.msra.mxu0 0.0
        %1070 = vmatpush.msra.mxu0 0.0
        %1071 = vmatpush.msra.mxu0 0.0
        %1072 = vmatpush.msra.mxu0 0.0
        %1073 = vmatpush.msra.mxu0 %v1056
        %1074 = vmatpush.msra.mxu0 %v1055
        %1075 = vmatpush.msra.mxu0 %v1054
        %1076 = vmatpush.msra.mxu0 %v1053
        %1077 = vmatmul.f32.gmra.mxu0 %v1059
        %v1078 = vpop.f32.mrf.mxu0
        %v1079 = vadd.f32 %v1057, %v1078
        %1080 = vdwg.mxu0
        %v1081 = vld [vmem:[%s18] sm:$0x1]
        %v1082 = vld [vmem:[%s19] sm:$0x1]
        %vm1083 = vcmask 122880
        %v1084 = vsel %vm1083, %v1079, 0.0
        %1085 = vadd.xlane.f32.xlu0 %v1084
        %v1086 = vpop.xlane.xlu0 %1085
        %v1087 = vrcp.pop 16.0
        %v1088 = vmul.f32 16.0, %v1087
        %v1089 = vsub.f32 1.0, %v1088
        %v1090 = vmul.f32 %v1087, %v1089
        %v1091 = vadd.f32 %v1087, %v1090
        %vm1092 = vweird.f32 %v1087
        %v1093 = vsel %vm1092, %v1087, %v1091
        %v1094 = vmul.f32 %v1086, %v1093
        %v1095 = vsub.f32 %v1079, %v1094
        %v1096 = vmul.f32 %v1095, %v1095
        %v1097 = vsel %vm1083, %v1096, 0.0
        %1098 = vadd.xlane.f32.xlu0 %v1097
        %v1099 = vpop.xlane.xlu0 %1098
        %v1100 = vmul.f32 %v1099, %v1093
        %v1101 = vadd.f32 %v1100, 1e-05
        %v1102 = vrsqrt.pop %v1101
        %v1103 = vmul.f32 %v1102, %v1101
        %v1104 = vmul.f32 %v1103, %v1102
        %v1105 = vmul.f32 0.5, %v1104
        %v1106 = vsub.f32 1.5, %v1105
        %v1107 = vmul.f32 %v1102, %v1106
        %vm1108 = vweird.f32 %v1101
        %vm1109 = vweird.f32 %v1102
        %vm1110 = vmor %vm1108, %vm1109
        %v1111 = vsel %vm1110, %v1102, %v1107
        %v1112 = vmul.f32 %v1095, %v1111
        %v1113 = vmul.f32 %v1112, %v1081
        %v1114 = vadd.f32 %v1113, %v1082
        %1115 = vst.msk [vmem:[%s621] sm:$0x1] %vm1083, %v1114
        %s1116 = sand.u32 %s467, 1
        %s1117 = scalar_lea.sflag [#allocation3], %s1116
        %s1118 = sand.u32 %s467, 1
        %s1119 = scalar_lea.vmem [#allocation2], %s1118
        // Predicated region
        $region101: #{tpu_custom_call.1} parent=99 // pred_check
          %p1120 = pneg %p477
        $region102: #{tpu_custom_call.1} parent=99 // pred_check_branch
          %1122 = sbr.rel (%p1120) target = $region104
        $region103: #{tpu_custom_call.1} parent=99 // pred_region
          %1124 = vsyncadd %s1117, 0
          %s1125 = scalar_lea.hbm %s20, %s34
          %s1127 = sshll.u32 %s1119, 4
          %s1128 = int_to_ptr.vmem [resolvable:$true] %s1127
          %s1129 = sshll.u32 %s1125, 4
          %s1130 = int_to_ptr.hbm [resolvable:$true] %s1129
          %1132 = dma.vmem_to_hbm [thread:$0]  %s1128, 16, %s1130, %s1117
        $region104: #{tpu_custom_call.1} parent=99 // pred_fallthru
          _
      $region100: #{tpu_custom_call.1} parent=5 // pred_fallthru
        _
      %p1133 = scmp.le.s32.totalorder 2, %s29
      // Predicated region
      $region105: #{tpu_custom_call.1} parent=5 // pred_check
        %p1134 = pneg %p1133
      $region106: #{tpu_custom_call.1} parent=5 // pred_check_branch
        %1136 = sbr.rel (%p1134) target = $region108
      $region107: #{tpu_custom_call.1} parent=5 // pred_region
        %s1137 = ssub.s32 %s29, 2
        // Predicated region
        $region109: #{tpu_custom_call.1} parent=107 // pred_check
          %p1138 = pneg %p483
        $region110: #{tpu_custom_call.1} parent=107 // pred_check_branch
          %1140 = sbr.rel (%p1138) target = $region112
        $region111: #{tpu_custom_call.1} parent=107 // pred_region
          %s1141 = sand.u32 %s468, 1
          %s1142 = scalar_lea.sflag [#allocation3], %s1141
          %s1143 = sand.u32 %s468, 1
          %s1144 = scalar_lea.vmem [#allocation2], %s1143
          %1146 = dma.done %s1142, 16
        $region112: #{tpu_custom_call.1} parent=107 // pred_fallthru
          _
      $region108: #{tpu_custom_call.1} parent=5 // pred_fallthru
        _
    $region6: #{tpu_custom_call.1} parent=1 // loop_footer
      %s33 = sadd.s32 1, %s29
    $region7: #{tpu_custom_call.1} parent=1 // loop_footer_branch
      %28 = sbr.rel target = $region3
    $region8: #{tpu_custom_call.1} parent=1 // loop_exit
      _
    %1147 = vsyncpa [#allocation3], 1
    %s1148 = scalar_lea.sflag [#allocation3], 1
    %1149 = vsyncpa %s1148, 1

</llo_original>
